<compile_context>
chip_gen: v6e
topology: v6e:2x2x1
jax: 0.10.0
libtpu: 0.0.40
codegen_flags: <defaults>
</compile_context>

<pallas_src>
import functools
import math

import jax
import jax.numpy as jnp
from jax import lax
from jax.experimental import pallas as pl
from jax.experimental.pallas import tpu as pltpu


def _lca_kernel(
    b_ref,        # VMEM (D, 1)        f32 : ff_input * time_step_size
    noise_ref,    # VMEM (T, D, TILE)  f32 : standard-normal draws for this tile
    rts_ref,      # VMEM (1, TILE)     f32 : output reaction times
    dec_ref,      # VMEM (1, TILE)     i32 : output decisions (argmax index)
    *,
    num_time_steps: int,
    decay: float,        # 1 - leak * dt
    excite: float,       # (competition + self_excitation) * dt
    inhibit: float,      # competition * dt
    noise_scale: float,  # noise * sqrt(0.001)   (module hardcodes sqrt(0.001))
    rt_value: float,     # num_time_steps * dt + non_decision_time
    unroll,
):
    d, tile = noise_ref.shape[1], noise_ref.shape[2]

    # Hoist the lane-broadcast of the feed-forward drive out of the time loop
    # (JAX does not CSE broadcast_in_dim).
    drive = jnp.broadcast_to(b_ref[...], (d, tile))

    def step(t, pre):
        act = jnp.maximum(pre, 0.0)                     # relu(previous pre)
        total = jnp.sum(act, axis=0, keepdims=True)     # (1, TILE) sublane reduce
        z = noise_ref[t]                                # (D, TILE)
        # pre*(1-leak*dt) + ff*dt + (comp+selfexc)*dt*act - comp*dt*sum(act) + noise
        return (pre * decay + drive + excite * act
                - inhibit * total + noise_scale * z)

    pre = jnp.zeros((d, tile), jnp.float32)
    pre = lax.fori_loop(0, num_time_steps, step, pre, unroll=unroll)
    act = jnp.maximum(pre, 0.0)

    # rts = (sum_t active) * dt + t0 with active == 1 every step -> constant.
    rts_ref[...] = jnp.full(rts_ref.shape, rt_value, dtype=rts_ref.dtype)

    # decisions = argmax over accumulators (first index on ties, like torch.max).
    maxv = jnp.max(act, axis=0, keepdims=True)
    ids = lax.broadcasted_iota(jnp.int32, act.shape, 0)
    big = jnp.int32(jnp.iinfo(jnp.int32).max)
    dec_ref[...] = jnp.min(jnp.where(act == maxv, ids, big),
                           axis=0, keepdims=True).astype(jnp.int32)


def lca_model_forward(
    ff_input,
    noise_z,
    *,
    leak: float = 0.1,
    competition: float = 0.1,
    self_excitation: float = 0.0,
    noise: float = 1.0,
    time_step_size: float = 0.01,
    non_decision_time: float = 0.0,
    tile_sim: int = 128,
    unroll=True,
):
    """Pallas equivalent of LCAModel.forward. Returns (rts, decisions).

    ff_input: (num_lca_dim,) feed-forward drive.
    noise_z : (num_time_steps, num_lca_dim, num_simulations) N(0,1) draws.
    rts: (num_simulations, 1) float32; decisions: (num_simulations, 1) int32
      # TODO(synk): torch returns int64 indices; int32 used here (no x64).
    """
    d = int(ff_input.shape[-1])
    num_time_steps, d_z, num_simulations = (int(s) for s in noise_z.shape)
    assert d_z == d
    tile_sim = min(int(tile_sim), num_simulations)
    assert num_simulations % tile_sim == 0
    assert tile_sim == num_simulations or tile_sim % 128 == 0, (
        "tile_sim must be lane-dense (multiple of 128) when tiling the grid")

    b = (ff_input.astype(jnp.float32) * time_step_size).reshape(d, 1)
    noise_z = noise_z.astype(jnp.float32)

    kernel = functools.partial(
        _lca_kernel,
        num_time_steps=num_time_steps,
        decay=float(1.0 - leak * time_step_size),
        excite=float((competition + self_excitation) * time_step_size),
        inhibit=float(competition * time_step_size),
        noise_scale=float(noise * math.sqrt(0.001)),
        rt_value=float(num_time_steps * time_step_size + non_decision_time),
        unroll=unroll,
    )

    grid = (num_simulations // tile_sim,)
    out_shapes = (
        jax.ShapeDtypeStruct((1, num_simulations), jnp.float32),
        jax.ShapeDtypeStruct((1, num_simulations), jnp.int32),
    )

    rts_row, dec_row = pl.pallas_call(
        kernel,
        out_shape=out_shapes,
        grid_spec=pltpu.PrefetchScalarGridSpec(
            num_scalar_prefetch=0,
            grid=grid,
            in_specs=[
                pl.BlockSpec((d, 1), lambda i: (0, 0)),
                pl.BlockSpec((num_time_steps, d, tile_sim), lambda i: (0, 0, i)),
            ],
            out_specs=[
                pl.BlockSpec((1, tile_sim), lambda i: (0, i)),
                pl.BlockSpec((1, tile_sim), lambda i: (0, i)),
            ],
        ),
        compiler_params=pltpu.CompilerParams(
            # Sim tiles are fully independent -> shard across TCs on v7x.
            dimension_semantics=("parallel",),
        ),
    )(b, noise_z)

    rts = rts_row.reshape(num_simulations, 1)
    decisions = dec_row.reshape(num_simulations, 1)
    return rts, decisions


def _lca_reference(ff_input, noise_z, *, leak, competition, self_excitation,
                   noise, time_step_size, non_decision_time):
    """Pure-JAX reference mirroring the PyTorch LCAModel/LCALayer forward."""
    num_time_steps, d, num_sims = (int(s) for s in noise_z.shape)
    eye = jnp.eye(d, dtype=jnp.float32)
    gamma = (1.0 - eye) * competition - eye * self_excitation
    sqrt_step = math.sqrt(0.001)
    pre = jnp.zeros((num_sims, d), jnp.float32)
    act = jnp.zeros((num_sims, d), jnp.float32)
    for t in range(num_time_steps):
        pre = pre + (ff_input[None, :] - leak * pre - act @ gamma) * time_step_size
        pre = pre + (noise_z[t].T * noise) * sqrt_step
        act = jnp.maximum(pre, 0.0)
    rts = jnp.full((num_sims, 1),
                   num_time_steps * time_step_size + non_decision_time,
                   dtype=jnp.float32)
    dec = jnp.argmax(act, axis=1).reshape(num_sims, 1).astype(jnp.int32)
    return rts, dec


if __name__ == "__main__":
    key = jax.random.PRNGKey(0)
    k_ff, k_noise = jax.random.split(key)

    num_lca_dim = 8
    num_simulations = 128
    num_time_steps = 50
    leak = 0.1
    competition = 0.1
    self_excitation = 0.0
    noise = 1.0
    time_step_size = 0.01
    non_decision_time = 0.0

    ff_input = jax.random.uniform(k_ff, (num_lca_dim,), dtype=jnp.float32)
    noise_z = jax.random.normal(
        k_noise, (num_time_steps, num_lca_dim, num_simulations),
        dtype=jnp.float32)

    # Stochastic run (matches the PyTorch module's default noise=1.0).
    rts, decisions = lca_model_forward(
        ff_input, noise_z,
        leak=leak, competition=competition, self_excitation=self_excitation,
        noise=noise, time_step_size=time_step_size,
        non_decision_time=non_decision_time, tile_sim=128)
    jax.block_until_ready((rts, decisions))

    expected_rt = num_time_steps * time_step_size + non_decision_time
    assert rts.shape == (num_simulations, 1)
    assert decisions.shape == (num_simulations, 1)
    assert bool(jnp.allclose(rts, expected_rt, atol=1e-5))
    assert bool(jnp.all((decisions >= 0) & (decisions < num_lca_dim)))

    # Cross-check against a pure-JAX reference consuming the same noise draws.
    rts_ref, dec_ref = _lca_reference(
        ff_input, noise_z, leak=leak, competition=competition,
        self_excitation=self_excitation, noise=noise,
        time_step_size=time_step_size, non_decision_time=non_decision_time)
    assert bool(jnp.allclose(rts, rts_ref, atol=1e-5))
    match = float(jnp.mean((decisions == dec_ref).astype(jnp.float32)))
    assert match >= 0.99, f"decision mismatch fraction: {1.0 - match}"

    # Deterministic run (noise disabled) must match the reference exactly.
    rts0, dec0 = lca_model_forward(
        ff_input, noise_z,
        leak=leak, competition=competition, self_excitation=self_excitation,
        noise=0.0, time_step_size=time_step_size,
        non_decision_time=non_decision_time, tile_sim=128)
    rts0_ref, dec0_ref = _lca_reference(
        ff_input, noise_z, leak=leak, competition=competition,
        self_excitation=self_excitation, noise=0.0,
        time_step_size=time_step_size, non_decision_time=non_decision_time)
    jax.block_until_ready((rts0, dec0))
    assert bool(jnp.allclose(rts0, rts0_ref, atol=1e-6))
    assert bool(jnp.all(dec0 == dec0_ref))

    print("KERNEL_OK")
</pallas_src>

<mosaic_0001>
module attributes {stable_mosaic.version = 11 : i64} {
  func.func @_lca_kernel(%arg0: i32, %arg1: memref<8x1xf32, #tpu.memory_space<vmem>>, %arg2: memref<50x8x128xf32, #tpu.memory_space<vmem>>, %arg3: memref<1x128xf32, #tpu.memory_space<vmem>>, %arg4: memref<1x128xi32, #tpu.memory_space<vmem>>) attributes {dimension_semantics = [#tpu.dimension_semantics<parallel>], iteration_bounds = array<i64: 1>, scalar_prefetch = 0 : i64, scratch_operands = 0 : i64, tpu.core_type = #tpu.core_type<tc>, window_params = [{pipeline_mode = #tpu.pipeline_mode<synchronous>, transform_indices = @transform_0, window_bounds = array<i64: 8, 1>}, {transform_indices = @transform_1, window_bounds = array<i64: 50, 8, 128>}, {transform_indices = @transform_2, window_bounds = array<i64: 1, 128>}, {transform_indices = @transform_3, window_bounds = array<i64: 1, 128>}]} {
    %c0 = arith.constant 0 : index
    %c0_0 = arith.constant 0 : index
    %0 = vector.load %arg1[%c0, %c0_0] : memref<8x1xf32, #tpu.memory_space<vmem>>, vector<8x1xf32>
    %1 = vector.shape_cast %0 : vector<8x1xf32> to vector<8x1xf32>
    %2 = vector.broadcast %1 : vector<8x1xf32> to vector<8x128xf32>
    %cst = arith.constant 0.000000e+00 : f32
    %3 = vector.broadcast %cst : f32 to vector<8x128xf32>
    %c0_i32 = arith.constant 0 : i32
    %cst_1 = arith.constant 0.000000e+00 : f32
    %4 = vector.broadcast %cst_1 : f32 to vector<8x128xf32>
    %5 = arith.maximumf %3, %4 : vector<8x128xf32>
    %cst_2 = arith.constant dense<0.000000e+00> : vector<128xf32>
    %6 = vector.multi_reduction <add>, %5, %cst_2 [0] : vector<8x128xf32> to vector<128xf32>
    %7 = vector.shape_cast %6 : vector<128xf32> to vector<1x128xf32>
    %8 = arith.index_cast %c0_i32 : i32 to index
    %c0_3 = arith.constant 0 : index
    %c0_4 = arith.constant 0 : index
    %9 = vector.load %arg2[%8, %c0_3, %c0_4] : memref<50x8x128xf32, #tpu.memory_space<vmem>>, vector<1x8x128xf32>
    %10 = vector.shape_cast %9 : vector<1x8x128xf32> to vector<8x128xf32>
    %cst_5 = arith.constant 9.990000e-01 : f32
    %11 = vector.broadcast %cst_5 : f32 to vector<8x128xf32>
    %12 = arith.mulf %3, %11 : vector<8x128xf32>
    %13 = arith.addf %12, %2 : vector<8x128xf32>
    %cst_6 = arith.constant 1.000000e-03 : f32
    %14 = vector.broadcast %cst_6 : f32 to vector<8x128xf32>
    %15 = arith.mulf %14, %5 : vector<8x128xf32>
    %16 = arith.addf %13, %15 : vector<8x128xf32>
    %cst_7 = arith.constant 1.000000e-03 : f32
    %17 = vector.broadcast %cst_7 : f32 to vector<1x128xf32>
    %18 = arith.mulf %17, %7 : vector<1x128xf32>
    %19 = vector.broadcast %18 : vector<1x128xf32> to vector<8x128xf32>
    %20 = arith.subf %16, %19 : vector<8x128xf32>
    %cst_8 = arith.constant 0.0316227749 : f32
    %21 = vector.broadcast %cst_8 : f32 to vector<8x128xf32>
    %22 = arith.mulf %21, %10 : vector<8x128xf32>
    %23 = arith.addf %20, %22 : vector<8x128xf32>
    %c1_i32 = arith.constant 1 : i32
    %cst_9 = arith.constant 0.000000e+00 : f32
    %24 = vector.broadcast %cst_9 : f32 to vector<8x128xf32>
    %25 = arith.maximumf %23, %24 : vector<8x128xf32>
    %cst_10 = arith.constant dense<0.000000e+00> : vector<128xf32>
    %26 = vector.multi_reduction <add>, %25, %cst_10 [0] : vector<8x128xf32> to vector<128xf32>
    %27 = vector.shape_cast %26 : vector<128xf32> to vector<1x128xf32>
    %28 = arith.index_cast %c1_i32 : i32 to index
    %c0_11 = arith.constant 0 : index
    %c0_12 = arith.constant 0 : index
    %29 = vector.load %arg2[%28, %c0_11, %c0_12] : memref<50x8x128xf32, #tpu.memory_space<vmem>>, vector<1x8x128xf32>
    %30 = vector.shape_cast %29 : vector<1x8x128xf32> to vector<8x128xf32>
    %cst_13 = arith.constant 9.990000e-01 : f32
    %31 = vector.broadcast %cst_13 : f32 to vector<8x128xf32>
    %32 = arith.mulf %23, %31 : vector<8x128xf32>
    %33 = arith.addf %32, %2 : vector<8x128xf32>
    %cst_14 = arith.constant 1.000000e-03 : f32
    %34 = vector.broadcast %cst_14 : f32 to vector<8x128xf32>
    %35 = arith.mulf %34, %25 : vector<8x128xf32>
    %36 = arith.addf %33, %35 : vector<8x128xf32>
    %cst_15 = arith.constant 1.000000e-03 : f32
    %37 = vector.broadcast %cst_15 : f32 to vector<1x128xf32>
    %38 = arith.mulf %37, %27 : vector<1x128xf32>
    %39 = vector.broadcast %38 : vector<1x128xf32> to vector<8x128xf32>
    %40 = arith.subf %36, %39 : vector<8x128xf32>
    %cst_16 = arith.constant 0.0316227749 : f32
    %41 = vector.broadcast %cst_16 : f32 to vector<8x128xf32>
    %42 = arith.mulf %41, %30 : vector<8x128xf32>
    %43 = arith.addf %40, %42 : vector<8x128xf32>
    %c2_i32 = arith.constant 2 : i32
    %cst_17 = arith.constant 0.000000e+00 : f32
    %44 = vector.broadcast %cst_17 : f32 to vector<8x128xf32>
    %45 = arith.maximumf %43, %44 : vector<8x128xf32>
    %cst_18 = arith.constant dense<0.000000e+00> : vector<128xf32>
    %46 = vector.multi_reduction <add>, %45, %cst_18 [0] : vector<8x128xf32> to vector<128xf32>
    %47 = vector.shape_cast %46 : vector<128xf32> to vector<1x128xf32>
    %48 = arith.index_cast %c2_i32 : i32 to index
    %c0_19 = arith.constant 0 : index
    %c0_20 = arith.constant 0 : index
    %49 = vector.load %arg2[%48, %c0_19, %c0_20] : memref<50x8x128xf32, #tpu.memory_space<vmem>>, vector<1x8x128xf32>
    %50 = vector.shape_cast %49 : vector<1x8x128xf32> to vector<8x128xf32>
    %cst_21 = arith.constant 9.990000e-01 : f32
    %51 = vector.broadcast %cst_21 : f32 to vector<8x128xf32>
    %52 = arith.mulf %43, %51 : vector<8x128xf32>
    %53 = arith.addf %52, %2 : vector<8x128xf32>
    %cst_22 = arith.constant 1.000000e-03 : f32
    %54 = vector.broadcast %cst_22 : f32 to vector<8x128xf32>
    %55 = arith.mulf %54, %45 : vector<8x128xf32>
    %56 = arith.addf %53, %55 : vector<8x128xf32>
    %cst_23 = arith.constant 1.000000e-03 : f32
    %57 = vector.broadcast %cst_23 : f32 to vector<1x128xf32>
    %58 = arith.mulf %57, %47 : vector<1x128xf32>
    %59 = vector.broadcast %58 : vector<1x128xf32> to vector<8x128xf32>
    %60 = arith.subf %56, %59 : vector<8x128xf32>
    %cst_24 = arith.constant 0.0316227749 : f32
    %61 = vector.broadcast %cst_24 : f32 to vector<8x128xf32>
    %62 = arith.mulf %61, %50 : vector<8x128xf32>
    %63 = arith.addf %60, %62 : vector<8x128xf32>
    %c3_i32 = arith.constant 3 : i32
    %cst_25 = arith.constant 0.000000e+00 : f32
    %64 = vector.broadcast %cst_25 : f32 to vector<8x128xf32>
    %65 = arith.maximumf %63, %64 : vector<8x128xf32>
    %cst_26 = arith.constant dense<0.000000e+00> : vector<128xf32>
    %66 = vector.multi_reduction <add>, %65, %cst_26 [0] : vector<8x128xf32> to vector<128xf32>
    %67 = vector.shape_cast %66 : vector<128xf32> to vector<1x128xf32>
    %68 = arith.index_cast %c3_i32 : i32 to index
    %c0_27 = arith.constant 0 : index
    %c0_28 = arith.constant 0 : index
    %69 = vector.load %arg2[%68, %c0_27, %c0_28] : memref<50x8x128xf32, #tpu.memory_space<vmem>>, vector<1x8x128xf32>
    %70 = vector.shape_cast %69 : vector<1x8x128xf32> to vector<8x128xf32>
    %cst_29 = arith.constant 9.990000e-01 : f32
    %71 = vector.broadcast %cst_29 : f32 to vector<8x128xf32>
    %72 = arith.mulf %63, %71 : vector<8x128xf32>
    %73 = arith.addf %72, %2 : vector<8x128xf32>
    %cst_30 = arith.constant 1.000000e-03 : f32
    %74 = vector.broadcast %cst_30 : f32 to vector<8x128xf32>
    %75 = arith.mulf %74, %65 : vector<8x128xf32>
    %76 = arith.addf %73, %75 : vector<8x128xf32>
    %cst_31 = arith.constant 1.000000e-03 : f32
    %77 = vector.broadcast %cst_31 : f32 to vector<1x128xf32>
    %78 = arith.mulf %77, %67 : vector<1x128xf32>
    %79 = vector.broadcast %78 : vector<1x128xf32> to vector<8x128xf32>
    %80 = arith.subf %76, %79 : vector<8x128xf32>
    %cst_32 = arith.constant 0.0316227749 : f32
    %81 = vector.broadcast %cst_32 : f32 to vector<8x128xf32>
    %82 = arith.mulf %81, %70 : vector<8x128xf32>
    %83 = arith.addf %80, %82 : vector<8x128xf32>
    %c4_i32 = arith.constant 4 : i32
    %cst_33 = arith.constant 0.000000e+00 : f32
    %84 = vector.broadcast %cst_33 : f32 to vector<8x128xf32>
    %85 = arith.maximumf %83, %84 : vector<8x128xf32>
    %cst_34 = arith.constant dense<0.000000e+00> : vector<128xf32>
    %86 = vector.multi_reduction <add>, %85, %cst_34 [0] : vector<8x128xf32> to vector<128xf32>
    %87 = vector.shape_cast %86 : vector<128xf32> to vector<1x128xf32>
    %88 = arith.index_cast %c4_i32 : i32 to index
    %c0_35 = arith.constant 0 : index
    %c0_36 = arith.constant 0 : index
    %89 = vector.load %arg2[%88, %c0_35, %c0_36] : memref<50x8x128xf32, #tpu.memory_space<vmem>>, vector<1x8x128xf32>
    %90 = vector.shape_cast %89 : vector<1x8x128xf32> to vector<8x128xf32>
    %cst_37 = arith.constant 9.990000e-01 : f32
    %91 = vector.broadcast %cst_37 : f32 to vector<8x128xf32>
    %92 = arith.mulf %83, %91 : vector<8x128xf32>
    %93 = arith.addf %92, %2 : vector<8x128xf32>
    %cst_38 = arith.constant 1.000000e-03 : f32
    %94 = vector.broadcast %cst_38 : f32 to vector<8x128xf32>
    %95 = arith.mulf %94, %85 : vector<8x128xf32>
    %96 = arith.addf %93, %95 : vector<8x128xf32>
    %cst_39 = arith.constant 1.000000e-03 : f32
    %97 = vector.broadcast %cst_39 : f32 to vector<1x128xf32>
    %98 = arith.mulf %97, %87 : vector<1x128xf32>
    %99 = vector.broadcast %98 : vector<1x128xf32> to vector<8x128xf32>
    %100 = arith.subf %96, %99 : vector<8x128xf32>
    %cst_40 = arith.constant 0.0316227749 : f32
    %101 = vector.broadcast %cst_40 : f32 to vector<8x128xf32>
    %102 = arith.mulf %101, %90 : vector<8x128xf32>
    %103 = arith.addf %100, %102 : vector<8x128xf32>
    %c5_i32 = arith.constant 5 : i32
    %cst_41 = arith.constant 0.000000e+00 : f32
    %104 = vector.broadcast %cst_41 : f32 to vector<8x128xf32>
    %105 = arith.maximumf %103, %104 : vector<8x128xf32>
    %cst_42 = arith.constant dense<0.000000e+00> : vector<128xf32>
    %106 = vector.multi_reduction <add>, %105, %cst_42 [0] : vector<8x128xf32> to vector<128xf32>
    %107 = vector.shape_cast %106 : vector<128xf32> to vector<1x128xf32>
    %108 = arith.index_cast %c5_i32 : i32 to index
    %c0_43 = arith.constant 0 : index
    %c0_44 = arith.constant 0 : index
    %109 = vector.load %arg2[%108, %c0_43, %c0_44] : memref<50x8x128xf32, #tpu.memory_space<vmem>>, vector<1x8x128xf32>
    %110 = vector.shape_cast %109 : vector<1x8x128xf32> to vector<8x128xf32>
    %cst_45 = arith.constant 9.990000e-01 : f32
    %111 = vector.broadcast %cst_45 : f32 to vector<8x128xf32>
    %112 = arith.mulf %103, %111 : vector<8x128xf32>
    %113 = arith.addf %112, %2 : vector<8x128xf32>
    %cst_46 = arith.constant 1.000000e-03 : f32
    %114 = vector.broadcast %cst_46 : f32 to vector<8x128xf32>
    %115 = arith.mulf %114, %105 : vector<8x128xf32>
    %116 = arith.addf %113, %115 : vector<8x128xf32>
    %cst_47 = arith.constant 1.000000e-03 : f32
    %117 = vector.broadcast %cst_47 : f32 to vector<1x128xf32>
    %118 = arith.mulf %117, %107 : vector<1x128xf32>
    %119 = vector.broadcast %118 : vector<1x128xf32> to vector<8x128xf32>
    %120 = arith.subf %116, %119 : vector<8x128xf32>
    %cst_48 = arith.constant 0.0316227749 : f32
    %121 = vector.broadcast %cst_48 : f32 to vector<8x128xf32>
    %122 = arith.mulf %121, %110 : vector<8x128xf32>
    %123 = arith.addf %120, %122 : vector<8x128xf32>
    %c6_i32 = arith.constant 6 : i32
    %cst_49 = arith.constant 0.000000e+00 : f32
    %124 = vector.broadcast %cst_49 : f32 to vector<8x128xf32>
    %125 = arith.maximumf %123, %124 : vector<8x128xf32>
    %cst_50 = arith.constant dense<0.000000e+00> : vector<128xf32>
    %126 = vector.multi_reduction <add>, %125, %cst_50 [0] : vector<8x128xf32> to vector<128xf32>
    %127 = vector.shape_cast %126 : vector<128xf32> to vector<1x128xf32>
    %128 = arith.index_cast %c6_i32 : i32 to index
    %c0_51 = arith.constant 0 : index
    %c0_52 = arith.constant 0 : index
    %129 = vector.load %arg2[%128, %c0_51, %c0_52] : memref<50x8x128xf32, #tpu.memory_space<vmem>>, vector<1x8x128xf32>
    %130 = vector.shape_cast %129 : vector<1x8x128xf32> to vector<8x128xf32>
    %cst_53 = arith.constant 9.990000e-01 : f32
    %131 = vector.broadcast %cst_53 : f32 to vector<8x128xf32>
    %132 = arith.mulf %123, %131 : vector<8x128xf32>
    %133 = arith.addf %132, %2 : vector<8x128xf32>
    %cst_54 = arith.constant 1.000000e-03 : f32
    %134 = vector.broadcast %cst_54 : f32 to vector<8x128xf32>
    %135 = arith.mulf %134, %125 : vector<8x128xf32>
    %136 = arith.addf %133, %135 : vector<8x128xf32>
    %cst_55 = arith.constant 1.000000e-03 : f32
    %137 = vector.broadcast %cst_55 : f32 to vector<1x128xf32>
    %138 = arith.mulf %137, %127 : vector<1x128xf32>
    %139 = vector.broadcast %138 : vector<1x128xf32> to vector<8x128xf32>
    %140 = arith.subf %136, %139 : vector<8x128xf32>
    %cst_56 = arith.constant 0.0316227749 : f32
    %141 = vector.broadcast %cst_56 : f32 to vector<8x128xf32>
    %142 = arith.mulf %141, %130 : vector<8x128xf32>
    %143 = arith.addf %140, %142 : vector<8x128xf32>
    %c7_i32 = arith.constant 7 : i32
    %cst_57 = arith.constant 0.000000e+00 : f32
    %144 = vector.broadcast %cst_57 : f32 to vector<8x128xf32>
    %145 = arith.maximumf %143, %144 : vector<8x128xf32>
    %cst_58 = arith.constant dense<0.000000e+00> : vector<128xf32>
    %146 = vector.multi_reduction <add>, %145, %cst_58 [0] : vector<8x128xf32> to vector<128xf32>
    %147 = vector.shape_cast %146 : vector<128xf32> to vector<1x128xf32>
    %148 = arith.index_cast %c7_i32 : i32 to index
    %c0_59 = arith.constant 0 : index
    %c0_60 = arith.constant 0 : index
    %149 = vector.load %arg2[%148, %c0_59, %c0_60] : memref<50x8x128xf32, #tpu.memory_space<vmem>>, vector<1x8x128xf32>
    %150 = vector.shape_cast %149 : vector<1x8x128xf32> to vector<8x128xf32>
    %cst_61 = arith.constant 9.990000e-01 : f32
    %151 = vector.broadcast %cst_61 : f32 to vector<8x128xf32>
    %152 = arith.mulf %143, %151 : vector<8x128xf32>
    %153 = arith.addf %152, %2 : vector<8x128xf32>
    %cst_62 = arith.constant 1.000000e-03 : f32
    %154 = vector.broadcast %cst_62 : f32 to vector<8x128xf32>
    %155 = arith.mulf %154, %145 : vector<8x128xf32>
    %156 = arith.addf %153, %155 : vector<8x128xf32>
    %cst_63 = arith.constant 1.000000e-03 : f32
    %157 = vector.broadcast %cst_63 : f32 to vector<1x128xf32>
    %158 = arith.mulf %157, %147 : vector<1x128xf32>
    %159 = vector.broadcast %158 : vector<1x128xf32> to vector<8x128xf32>
    %160 = arith.subf %156, %159 : vector<8x128xf32>
    %cst_64 = arith.constant 0.0316227749 : f32
    %161 = vector.broadcast %cst_64 : f32 to vector<8x128xf32>
    %162 = arith.mulf %161, %150 : vector<8x128xf32>
    %163 = arith.addf %160, %162 : vector<8x128xf32>
    %c8_i32 = arith.constant 8 : i32
    %cst_65 = arith.constant 0.000000e+00 : f32
    %164 = vector.broadcast %cst_65 : f32 to vector<8x128xf32>
    %165 = arith.maximumf %163, %164 : vector<8x128xf32>
    %cst_66 = arith.constant dense<0.000000e+00> : vector<128xf32>
    %166 = vector.multi_reduction <add>, %165, %cst_66 [0] : vector<8x128xf32> to vector<128xf32>
    %167 = vector.shape_cast %166 : vector<128xf32> to vector<1x128xf32>
    %168 = arith.index_cast %c8_i32 : i32 to index
    %c0_67 = arith.constant 0 : index
    %c0_68 = arith.constant 0 : index
    %169 = vector.load %arg2[%168, %c0_67, %c0_68] : memref<50x8x128xf32, #tpu.memory_space<vmem>>, vector<1x8x128xf32>
    %170 = vector.shape_cast %169 : vector<1x8x128xf32> to vector<8x128xf32>
    %cst_69 = arith.constant 9.990000e-01 : f32
    %171 = vector.broadcast %cst_69 : f32 to vector<8x128xf32>
    %172 = arith.mulf %163, %171 : vector<8x128xf32>
    %173 = arith.addf %172, %2 : vector<8x128xf32>
    %cst_70 = arith.constant 1.000000e-03 : f32
    %174 = vector.broadcast %cst_70 : f32 to vector<8x128xf32>
    %175 = arith.mulf %174, %165 : vector<8x128xf32>
    %176 = arith.addf %173, %175 : vector<8x128xf32>
    %cst_71 = arith.constant 1.000000e-03 : f32
    %177 = vector.broadcast %cst_71 : f32 to vector<1x128xf32>
    %178 = arith.mulf %177, %167 : vector<1x128xf32>
    %179 = vector.broadcast %178 : vector<1x128xf32> to vector<8x128xf32>
    %180 = arith.subf %176, %179 : vector<8x128xf32>
    %cst_72 = arith.constant 0.0316227749 : f32
    %181 = vector.broadcast %cst_72 : f32 to vector<8x128xf32>
    %182 = arith.mulf %181, %170 : vector<8x128xf32>
    %183 = arith.addf %180, %182 : vector<8x128xf32>
    %c9_i32 = arith.constant 9 : i32
    %cst_73 = arith.constant 0.000000e+00 : f32
    %184 = vector.broadcast %cst_73 : f32 to vector<8x128xf32>
    %185 = arith.maximumf %183, %184 : vector<8x128xf32>
    %cst_74 = arith.constant dense<0.000000e+00> : vector<128xf32>
    %186 = vector.multi_reduction <add>, %185, %cst_74 [0] : vector<8x128xf32> to vector<128xf32>
    %187 = vector.shape_cast %186 : vector<128xf32> to vector<1x128xf32>
    %188 = arith.index_cast %c9_i32 : i32 to index
    %c0_75 = arith.constant 0 : index
    %c0_76 = arith.constant 0 : index
    %189 = vector.load %arg2[%188, %c0_75, %c0_76] : memref<50x8x128xf32, #tpu.memory_space<vmem>>, vector<1x8x128xf32>
    %190 = vector.shape_cast %189 : vector<1x8x128xf32> to vector<8x128xf32>
    %cst_77 = arith.constant 9.990000e-01 : f32
    %191 = vector.broadcast %cst_77 : f32 to vector<8x128xf32>
    %192 = arith.mulf %183, %191 : vector<8x128xf32>
    %193 = arith.addf %192, %2 : vector<8x128xf32>
    %cst_78 = arith.constant 1.000000e-03 : f32
    %194 = vector.broadcast %cst_78 : f32 to vector<8x128xf32>
    %195 = arith.mulf %194, %185 : vector<8x128xf32>
    %196 = arith.addf %193, %195 : vector<8x128xf32>
    %cst_79 = arith.constant 1.000000e-03 : f32
    %197 = vector.broadcast %cst_79 : f32 to vector<1x128xf32>
    %198 = arith.mulf %197, %187 : vector<1x128xf32>
    %199 = vector.broadcast %198 : vector<1x128xf32> to vector<8x128xf32>
    %200 = arith.subf %196, %199 : vector<8x128xf32>
    %cst_80 = arith.constant 0.0316227749 : f32
    %201 = vector.broadcast %cst_80 : f32 to vector<8x128xf32>
    %202 = arith.mulf %201, %190 : vector<8x128xf32>
    %203 = arith.addf %200, %202 : vector<8x128xf32>
    %c10_i32 = arith.constant 10 : i32
    %cst_81 = arith.constant 0.000000e+00 : f32
    %204 = vector.broadcast %cst_81 : f32 to vector<8x128xf32>
    %205 = arith.maximumf %203, %204 : vector<8x128xf32>
    %cst_82 = arith.constant dense<0.000000e+00> : vector<128xf32>
    %206 = vector.multi_reduction <add>, %205, %cst_82 [0] : vector<8x128xf32> to vector<128xf32>
    %207 = vector.shape_cast %206 : vector<128xf32> to vector<1x128xf32>
    %208 = arith.index_cast %c10_i32 : i32 to index
    %c0_83 = arith.constant 0 : index
    %c0_84 = arith.constant 0 : index
    %209 = vector.load %arg2[%208, %c0_83, %c0_84] : memref<50x8x128xf32, #tpu.memory_space<vmem>>, vector<1x8x128xf32>
    %210 = vector.shape_cast %209 : vector<1x8x128xf32> to vector<8x128xf32>
    %cst_85 = arith.constant 9.990000e-01 : f32
    %211 = vector.broadcast %cst_85 : f32 to vector<8x128xf32>
    %212 = arith.mulf %203, %211 : vector<8x128xf32>
    %213 = arith.addf %212, %2 : vector<8x128xf32>
    %cst_86 = arith.constant 1.000000e-03 : f32
    %214 = vector.broadcast %cst_86 : f32 to vector<8x128xf32>
    %215 = arith.mulf %214, %205 : vector<8x128xf32>
    %216 = arith.addf %213, %215 : vector<8x128xf32>
    %cst_87 = arith.constant 1.000000e-03 : f32
    %217 = vector.broadcast %cst_87 : f32 to vector<1x128xf32>
    %218 = arith.mulf %217, %207 : vector<1x128xf32>
    %219 = vector.broadcast %218 : vector<1x128xf32> to vector<8x128xf32>
    %220 = arith.subf %216, %219 : vector<8x128xf32>
    %cst_88 = arith.constant 0.0316227749 : f32
    %221 = vector.broadcast %cst_88 : f32 to vector<8x128xf32>
    %222 = arith.mulf %221, %210 : vector<8x128xf32>
    %223 = arith.addf %220, %222 : vector<8x128xf32>
    %c11_i32 = arith.constant 11 : i32
    %cst_89 = arith.constant 0.000000e+00 : f32
    %224 = vector.broadcast %cst_89 : f32 to vector<8x128xf32>
    %225 = arith.maximumf %223, %224 : vector<8x128xf32>
    %cst_90 = arith.constant dense<0.000000e+00> : vector<128xf32>
    %226 = vector.multi_reduction <add>, %225, %cst_90 [0] : vector<8x128xf32> to vector<128xf32>
    %227 = vector.shape_cast %226 : vector<128xf32> to vector<1x128xf32>
    %228 = arith.index_cast %c11_i32 : i32 to index
    %c0_91 = arith.constant 0 : index
    %c0_92 = arith.constant 0 : index
    %229 = vector.load %arg2[%228, %c0_91, %c0_92] : memref<50x8x128xf32, #tpu.memory_space<vmem>>, vector<1x8x128xf32>
    %230 = vector.shape_cast %229 : vector<1x8x128xf32> to vector<8x128xf32>
    %cst_93 = arith.constant 9.990000e-01 : f32
    %231 = vector.broadcast %cst_93 : f32 to vector<8x128xf32>
    %232 = arith.mulf %223, %231 : vector<8x128xf32>
    %233 = arith.addf %232, %2 : vector<8x128xf32>
    %cst_94 = arith.constant 1.000000e-03 : f32
    %234 = vector.broadcast %cst_94 : f32 to vector<8x128xf32>
    %235 = arith.mulf %234, %225 : vector<8x128xf32>
    %236 = arith.addf %233, %235 : vector<8x128xf32>
    %cst_95 = arith.constant 1.000000e-03 : f32
    %237 = vector.broadcast %cst_95 : f32 to vector<1x128xf32>
    %238 = arith.mulf %237, %227 : vector<1x128xf32>
    %239 = vector.broadcast %238 : vector<1x128xf32> to vector<8x128xf32>
    %240 = arith.subf %236, %239 : vector<8x128xf32>
    %cst_96 = arith.constant 0.0316227749 : f32
    %241 = vector.broadcast %cst_96 : f32 to vector<8x128xf32>
    %242 = arith.mulf %241, %230 : vector<8x128xf32>
    %243 = arith.addf %240, %242 : vector<8x128xf32>
    %c12_i32 = arith.constant 12 : i32
    %cst_97 = arith.constant 0.000000e+00 : f32
    %244 = vector.broadcast %cst_97 : f32 to vector<8x128xf32>
    %245 = arith.maximumf %243, %244 : vector<8x128xf32>
    %cst_98 = arith.constant dense<0.000000e+00> : vector<128xf32>
    %246 = vector.multi_reduction <add>, %245, %cst_98 [0] : vector<8x128xf32> to vector<128xf32>
    %247 = vector.shape_cast %246 : vector<128xf32> to vector<1x128xf32>
    %248 = arith.index_cast %c12_i32 : i32 to index
    %c0_99 = arith.constant 0 : index
    %c0_100 = arith.constant 0 : index
    %249 = vector.load %arg2[%248, %c0_99, %c0_100] : memref<50x8x128xf32, #tpu.memory_space<vmem>>, vector<1x8x128xf32>
    %250 = vector.shape_cast %249 : vector<1x8x128xf32> to vector<8x128xf32>
    %cst_101 = arith.constant 9.990000e-01 : f32
    %251 = vector.broadcast %cst_101 : f32 to vector<8x128xf32>
    %252 = arith.mulf %243, %251 : vector<8x128xf32>
    %253 = arith.addf %252, %2 : vector<8x128xf32>
    %cst_102 = arith.constant 1.000000e-03 : f32
    %254 = vector.broadcast %cst_102 : f32 to vector<8x128xf32>
    %255 = arith.mulf %254, %245 : vector<8x128xf32>
    %256 = arith.addf %253, %255 : vector<8x128xf32>
    %cst_103 = arith.constant 1.000000e-03 : f32
    %257 = vector.broadcast %cst_103 : f32 to vector<1x128xf32>
    %258 = arith.mulf %257, %247 : vector<1x128xf32>
    %259 = vector.broadcast %258 : vector<1x128xf32> to vector<8x128xf32>
    %260 = arith.subf %256, %259 : vector<8x128xf32>
    %cst_104 = arith.constant 0.0316227749 : f32
    %261 = vector.broadcast %cst_104 : f32 to vector<8x128xf32>
    %262 = arith.mulf %261, %250 : vector<8x128xf32>
    %263 = arith.addf %260, %262 : vector<8x128xf32>
    %c13_i32 = arith.constant 13 : i32
    %cst_105 = arith.constant 0.000000e+00 : f32
    %264 = vector.broadcast %cst_105 : f32 to vector<8x128xf32>
    %265 = arith.maximumf %263, %264 : vector<8x128xf32>
    %cst_106 = arith.constant dense<0.000000e+00> : vector<128xf32>
    %266 = vector.multi_reduction <add>, %265, %cst_106 [0] : vector<8x128xf32> to vector<128xf32>
    %267 = vector.shape_cast %266 : vector<128xf32> to vector<1x128xf32>
    %268 = arith.index_cast %c13_i32 : i32 to index
    %c0_107 = arith.constant 0 : index
    %c0_108 = arith.constant 0 : index
    %269 = vector.load %arg2[%268, %c0_107, %c0_108] : memref<50x8x128xf32, #tpu.memory_space<vmem>>, vector<1x8x128xf32>
    %270 = vector.shape_cast %269 : vector<1x8x128xf32> to vector<8x128xf32>
    %cst_109 = arith.constant 9.990000e-01 : f32
    %271 = vector.broadcast %cst_109 : f32 to vector<8x128xf32>
    %272 = arith.mulf %263, %271 : vector<8x128xf32>
    %273 = arith.addf %272, %2 : vector<8x128xf32>
    %cst_110 = arith.constant 1.000000e-03 : f32
    %274 = vector.broadcast %cst_110 : f32 to vector<8x128xf32>
    %275 = arith.mulf %274, %265 : vector<8x128xf32>
    %276 = arith.addf %273, %275 : vector<8x128xf32>
    %cst_111 = arith.constant 1.000000e-03 : f32
    %277 = vector.broadcast %cst_111 : f32 to vector<1x128xf32>
    %278 = arith.mulf %277, %267 : vector<1x128xf32>
    %279 = vector.broadcast %278 : vector<1x128xf32> to vector<8x128xf32>
    %280 = arith.subf %276, %279 : vector<8x128xf32>
    %cst_112 = arith.constant 0.0316227749 : f32
    %281 = vector.broadcast %cst_112 : f32 to vector<8x128xf32>
    %282 = arith.mulf %281, %270 : vector<8x128xf32>
    %283 = arith.addf %280, %282 : vector<8x128xf32>
    %c14_i32 = arith.constant 14 : i32
    %cst_113 = arith.constant 0.000000e+00 : f32
    %284 = vector.broadcast %cst_113 : f32 to vector<8x128xf32>
    %285 = arith.maximumf %283, %284 : vector<8x128xf32>
    %cst_114 = arith.constant dense<0.000000e+00> : vector<128xf32>
    %286 = vector.multi_reduction <add>, %285, %cst_114 [0] : vector<8x128xf32> to vector<128xf32>
    %287 = vector.shape_cast %286 : vector<128xf32> to vector<1x128xf32>
    %288 = arith.index_cast %c14_i32 : i32 to index
    %c0_115 = arith.constant 0 : index
    %c0_116 = arith.constant 0 : index
    %289 = vector.load %arg2[%288, %c0_115, %c0_116] : memref<50x8x128xf32, #tpu.memory_space<vmem>>, vector<1x8x128xf32>
    %290 = vector.shape_cast %289 : vector<1x8x128xf32> to vector<8x128xf32>
    %cst_117 = arith.constant 9.990000e-01 : f32
    %291 = vector.broadcast %cst_117 : f32 to vector<8x128xf32>
    %292 = arith.mulf %283, %291 : vector<8x128xf32>
    %293 = arith.addf %292, %2 : vector<8x128xf32>
    %cst_118 = arith.constant 1.000000e-03 : f32
    %294 = vector.broadcast %cst_118 : f32 to vector<8x128xf32>
    %295 = arith.mulf %294, %285 : vector<8x128xf32>
    %296 = arith.addf %293, %295 : vector<8x128xf32>
    %cst_119 = arith.constant 1.000000e-03 : f32
    %297 = vector.broadcast %cst_119 : f32 to vector<1x128xf32>
    %298 = arith.mulf %297, %287 : vector<1x128xf32>
    %299 = vector.broadcast %298 : vector<1x128xf32> to vector<8x128xf32>
    %300 = arith.subf %296, %299 : vector<8x128xf32>
    %cst_120 = arith.constant 0.0316227749 : f32
    %301 = vector.broadcast %cst_120 : f32 to vector<8x128xf32>
    %302 = arith.mulf %301, %290 : vector<8x128xf32>
    %303 = arith.addf %300, %302 : vector<8x128xf32>
    %c15_i32 = arith.constant 15 : i32
    %cst_121 = arith.constant 0.000000e+00 : f32
    %304 = vector.broadcast %cst_121 : f32 to vector<8x128xf32>
    %305 = arith.maximumf %303, %304 : vector<8x128xf32>
    %cst_122 = arith.constant dense<0.000000e+00> : vector<128xf32>
    %306 = vector.multi_reduction <add>, %305, %cst_122 [0] : vector<8x128xf32> to vector<128xf32>
    %307 = vector.shape_cast %306 : vector<128xf32> to vector<1x128xf32>
    %308 = arith.index_cast %c15_i32 : i32 to index
    %c0_123 = arith.constant 0 : index
    %c0_124 = arith.constant 0 : index
    %309 = vector.load %arg2[%308, %c0_123, %c0_124] : memref<50x8x128xf32, #tpu.memory_space<vmem>>, vector<1x8x128xf32>
    %310 = vector.shape_cast %309 : vector<1x8x128xf32> to vector<8x128xf32>
    %cst_125 = arith.constant 9.990000e-01 : f32
    %311 = vector.broadcast %cst_125 : f32 to vector<8x128xf32>
    %312 = arith.mulf %303, %311 : vector<8x128xf32>
    %313 = arith.addf %312, %2 : vector<8x128xf32>
    %cst_126 = arith.constant 1.000000e-03 : f32
    %314 = vector.broadcast %cst_126 : f32 to vector<8x128xf32>
    %315 = arith.mulf %314, %305 : vector<8x128xf32>
    %316 = arith.addf %313, %315 : vector<8x128xf32>
    %cst_127 = arith.constant 1.000000e-03 : f32
    %317 = vector.broadcast %cst_127 : f32 to vector<1x128xf32>
    %318 = arith.mulf %317, %307 : vector<1x128xf32>
    %319 = vector.broadcast %318 : vector<1x128xf32> to vector<8x128xf32>
    %320 = arith.subf %316, %319 : vector<8x128xf32>
    %cst_128 = arith.constant 0.0316227749 : f32
    %321 = vector.broadcast %cst_128 : f32 to vector<8x128xf32>
    %322 = arith.mulf %321, %310 : vector<8x128xf32>
    %323 = arith.addf %320, %322 : vector<8x128xf32>
    %c16_i32 = arith.constant 16 : i32
    %cst_129 = arith.constant 0.000000e+00 : f32
    %324 = vector.broadcast %cst_129 : f32 to vector<8x128xf32>
    %325 = arith.maximumf %323, %324 : vector<8x128xf32>
    %cst_130 = arith.constant dense<0.000000e+00> : vector<128xf32>
    %326 = vector.multi_reduction <add>, %325, %cst_130 [0] : vector<8x128xf32> to vector<128xf32>
    %327 = vector.shape_cast %326 : vector<128xf32> to vector<1x128xf32>
    %328 = arith.index_cast %c16_i32 : i32 to index
    %c0_131 = arith.constant 0 : index
    %c0_132 = arith.constant 0 : index
    %329 = vector.load %arg2[%328, %c0_131, %c0_132] : memref<50x8x128xf32, #tpu.memory_space<vmem>>, vector<1x8x128xf32>
    %330 = vector.shape_cast %329 : vector<1x8x128xf32> to vector<8x128xf32>
    %cst_133 = arith.constant 9.990000e-01 : f32
    %331 = vector.broadcast %cst_133 : f32 to vector<8x128xf32>
    %332 = arith.mulf %323, %331 : vector<8x128xf32>
    %333 = arith.addf %332, %2 : vector<8x128xf32>
    %cst_134 = arith.constant 1.000000e-03 : f32
    %334 = vector.broadcast %cst_134 : f32 to vector<8x128xf32>
    %335 = arith.mulf %334, %325 : vector<8x128xf32>
    %336 = arith.addf %333, %335 : vector<8x128xf32>
    %cst_135 = arith.constant 1.000000e-03 : f32
    %337 = vector.broadcast %cst_135 : f32 to vector<1x128xf32>
    %338 = arith.mulf %337, %327 : vector<1x128xf32>
    %339 = vector.broadcast %338 : vector<1x128xf32> to vector<8x128xf32>
    %340 = arith.subf %336, %339 : vector<8x128xf32>
    %cst_136 = arith.constant 0.0316227749 : f32
    %341 = vector.broadcast %cst_136 : f32 to vector<8x128xf32>
    %342 = arith.mulf %341, %330 : vector<8x128xf32>
    %343 = arith.addf %340, %342 : vector<8x128xf32>
    %c17_i32 = arith.constant 17 : i32
    %cst_137 = arith.constant 0.000000e+00 : f32
    %344 = vector.broadcast %cst_137 : f32 to vector<8x128xf32>
    %345 = arith.maximumf %343, %344 : vector<8x128xf32>
    %cst_138 = arith.constant dense<0.000000e+00> : vector<128xf32>
    %346 = vector.multi_reduction <add>, %345, %cst_138 [0] : vector<8x128xf32> to vector<128xf32>
    %347 = vector.shape_cast %346 : vector<128xf32> to vector<1x128xf32>
    %348 = arith.index_cast %c17_i32 : i32 to index
    %c0_139 = arith.constant 0 : index
    %c0_140 = arith.constant 0 : index
    %349 = vector.load %arg2[%348, %c0_139, %c0_140] : memref<50x8x128xf32, #tpu.memory_space<vmem>>, vector<1x8x128xf32>
    %350 = vector.shape_cast %349 : vector<1x8x128xf32> to vector<8x128xf32>
    %cst_141 = arith.constant 9.990000e-01 : f32
    %351 = vector.broadcast %cst_141 : f32 to vector<8x128xf32>
    %352 = arith.mulf %343, %351 : vector<8x128xf32>
    %353 = arith.addf %352, %2 : vector<8x128xf32>
    %cst_142 = arith.constant 1.000000e-03 : f32
    %354 = vector.broadcast %cst_142 : f32 to vector<8x128xf32>
    %355 = arith.mulf %354, %345 : vector<8x128xf32>
    %356 = arith.addf %353, %355 : vector<8x128xf32>
    %cst_143 = arith.constant 1.000000e-03 : f32
    %357 = vector.broadcast %cst_143 : f32 to vector<1x128xf32>
    %358 = arith.mulf %357, %347 : vector<1x128xf32>
    %359 = vector.broadcast %358 : vector<1x128xf32> to vector<8x128xf32>
    %360 = arith.subf %356, %359 : vector<8x128xf32>
    %cst_144 = arith.constant 0.0316227749 : f32
    %361 = vector.broadcast %cst_144 : f32 to vector<8x128xf32>
    %362 = arith.mulf %361, %350 : vector<8x128xf32>
    %363 = arith.addf %360, %362 : vector<8x128xf32>
    %c18_i32 = arith.constant 18 : i32
    %cst_145 = arith.constant 0.000000e+00 : f32
    %364 = vector.broadcast %cst_145 : f32 to vector<8x128xf32>
    %365 = arith.maximumf %363, %364 : vector<8x128xf32>
    %cst_146 = arith.constant dense<0.000000e+00> : vector<128xf32>
    %366 = vector.multi_reduction <add>, %365, %cst_146 [0] : vector<8x128xf32> to vector<128xf32>
    %367 = vector.shape_cast %366 : vector<128xf32> to vector<1x128xf32>
    %368 = arith.index_cast %c18_i32 : i32 to index
    %c0_147 = arith.constant 0 : index
    %c0_148 = arith.constant 0 : index
    %369 = vector.load %arg2[%368, %c0_147, %c0_148] : memref<50x8x128xf32, #tpu.memory_space<vmem>>, vector<1x8x128xf32>
    %370 = vector.shape_cast %369 : vector<1x8x128xf32> to vector<8x128xf32>
    %cst_149 = arith.constant 9.990000e-01 : f32
    %371 = vector.broadcast %cst_149 : f32 to vector<8x128xf32>
    %372 = arith.mulf %363, %371 : vector<8x128xf32>
    %373 = arith.addf %372, %2 : vector<8x128xf32>
    %cst_150 = arith.constant 1.000000e-03 : f32
    %374 = vector.broadcast %cst_150 : f32 to vector<8x128xf32>
    %375 = arith.mulf %374, %365 : vector<8x128xf32>
    %376 = arith.addf %373, %375 : vector<8x128xf32>
    %cst_151 = arith.constant 1.000000e-03 : f32
    %377 = vector.broadcast %cst_151 : f32 to vector<1x128xf32>
    %378 = arith.mulf %377, %367 : vector<1x128xf32>
    %379 = vector.broadcast %378 : vector<1x128xf32> to vector<8x128xf32>
    %380 = arith.subf %376, %379 : vector<8x128xf32>
    %cst_152 = arith.constant 0.0316227749 : f32
    %381 = vector.broadcast %cst_152 : f32 to vector<8x128xf32>
    %382 = arith.mulf %381, %370 : vector<8x128xf32>
    %383 = arith.addf %380, %382 : vector<8x128xf32>
    %c19_i32 = arith.constant 19 : i32
    %cst_153 = arith.constant 0.000000e+00 : f32
    %384 = vector.broadcast %cst_153 : f32 to vector<8x128xf32>
    %385 = arith.maximumf %383, %384 : vector<8x128xf32>
    %cst_154 = arith.constant dense<0.000000e+00> : vector<128xf32>
    %386 = vector.multi_reduction <add>, %385, %cst_154 [0] : vector<8x128xf32> to vector<128xf32>
    %387 = vector.shape_cast %386 : vector<128xf32> to vector<1x128xf32>
    %388 = arith.index_cast %c19_i32 : i32 to index
    %c0_155 = arith.constant 0 : index
    %c0_156 = arith.constant 0 : index
    %389 = vector.load %arg2[%388, %c0_155, %c0_156] : memref<50x8x128xf32, #tpu.memory_space<vmem>>, vector<1x8x128xf32>
    %390 = vector.shape_cast %389 : vector<1x8x128xf32> to vector<8x128xf32>
    %cst_157 = arith.constant 9.990000e-01 : f32
    %391 = vector.broadcast %cst_157 : f32 to vector<8x128xf32>
    %392 = arith.mulf %383, %391 : vector<8x128xf32>
    %393 = arith.addf %392, %2 : vector<8x128xf32>
    %cst_158 = arith.constant 1.000000e-03 : f32
    %394 = vector.broadcast %cst_158 : f32 to vector<8x128xf32>
    %395 = arith.mulf %394, %385 : vector<8x128xf32>
    %396 = arith.addf %393, %395 : vector<8x128xf32>
    %cst_159 = arith.constant 1.000000e-03 : f32
    %397 = vector.broadcast %cst_159 : f32 to vector<1x128xf32>
    %398 = arith.mulf %397, %387 : vector<1x128xf32>
    %399 = vector.broadcast %398 : vector<1x128xf32> to vector<8x128xf32>
    %400 = arith.subf %396, %399 : vector<8x128xf32>
    %cst_160 = arith.constant 0.0316227749 : f32
    %401 = vector.broadcast %cst_160 : f32 to vector<8x128xf32>
    %402 = arith.mulf %401, %390 : vector<8x128xf32>
    %403 = arith.addf %400, %402 : vector<8x128xf32>
    %c20_i32 = arith.constant 20 : i32
    %cst_161 = arith.constant 0.000000e+00 : f32
    %404 = vector.broadcast %cst_161 : f32 to vector<8x128xf32>
    %405 = arith.maximumf %403, %404 : vector<8x128xf32>
    %cst_162 = arith.constant dense<0.000000e+00> : vector<128xf32>
    %406 = vector.multi_reduction <add>, %405, %cst_162 [0] : vector<8x128xf32> to vector<128xf32>
    %407 = vector.shape_cast %406 : vector<128xf32> to vector<1x128xf32>
    %408 = arith.index_cast %c20_i32 : i32 to index
    %c0_163 = arith.constant 0 : index
    %c0_164 = arith.constant 0 : index
    %409 = vector.load %arg2[%408, %c0_163, %c0_164] : memref<50x8x128xf32, #tpu.memory_space<vmem>>, vector<1x8x128xf32>
    %410 = vector.shape_cast %409 : vector<1x8x128xf32> to vector<8x128xf32>
    %cst_165 = arith.constant 9.990000e-01 : f32
    %411 = vector.broadcast %cst_165 : f32 to vector<8x128xf32>
    %412 = arith.mulf %403, %411 : vector<8x128xf32>
    %413 = arith.addf %412, %2 : vector<8x128xf32>
    %cst_166 = arith.constant 1.000000e-03 : f32
    %414 = vector.broadcast %cst_166 : f32 to vector<8x128xf32>
    %415 = arith.mulf %414, %405 : vector<8x128xf32>
    %416 = arith.addf %413, %415 : vector<8x128xf32>
    %cst_167 = arith.constant 1.000000e-03 : f32
    %417 = vector.broadcast %cst_167 : f32 to vector<1x128xf32>
    %418 = arith.mulf %417, %407 : vector<1x128xf32>
    %419 = vector.broadcast %418 : vector<1x128xf32> to vector<8x128xf32>
    %420 = arith.subf %416, %419 : vector<8x128xf32>
    %cst_168 = arith.constant 0.0316227749 : f32
    %421 = vector.broadcast %cst_168 : f32 to vector<8x128xf32>
    %422 = arith.mulf %421, %410 : vector<8x128xf32>
    %423 = arith.addf %420, %422 : vector<8x128xf32>
    %c21_i32 = arith.constant 21 : i32
    %cst_169 = arith.constant 0.000000e+00 : f32
    %424 = vector.broadcast %cst_169 : f32 to vector<8x128xf32>
    %425 = arith.maximumf %423, %424 : vector<8x128xf32>
    %cst_170 = arith.constant dense<0.000000e+00> : vector<128xf32>
    %426 = vector.multi_reduction <add>, %425, %cst_170 [0] : vector<8x128xf32> to vector<128xf32>
    %427 = vector.shape_cast %426 : vector<128xf32> to vector<1x128xf32>
    %428 = arith.index_cast %c21_i32 : i32 to index
    %c0_171 = arith.constant 0 : index
    %c0_172 = arith.constant 0 : index
    %429 = vector.load %arg2[%428, %c0_171, %c0_172] : memref<50x8x128xf32, #tpu.memory_space<vmem>>, vector<1x8x128xf32>
    %430 = vector.shape_cast %429 : vector<1x8x128xf32> to vector<8x128xf32>
    %cst_173 = arith.constant 9.990000e-01 : f32
    %431 = vector.broadcast %cst_173 : f32 to vector<8x128xf32>
    %432 = arith.mulf %423, %431 : vector<8x128xf32>
    %433 = arith.addf %432, %2 : vector<8x128xf32>
    %cst_174 = arith.constant 1.000000e-03 : f32
    %434 = vector.broadcast %cst_174 : f32 to vector<8x128xf32>
    %435 = arith.mulf %434, %425 : vector<8x128xf32>
    %436 = arith.addf %433, %435 : vector<8x128xf32>
    %cst_175 = arith.constant 1.000000e-03 : f32
    %437 = vector.broadcast %cst_175 : f32 to vector<1x128xf32>
    %438 = arith.mulf %437, %427 : vector<1x128xf32>
    %439 = vector.broadcast %438 : vector<1x128xf32> to vector<8x128xf32>
    %440 = arith.subf %436, %439 : vector<8x128xf32>
    %cst_176 = arith.constant 0.0316227749 : f32
    %441 = vector.broadcast %cst_176 : f32 to vector<8x128xf32>
    %442 = arith.mulf %441, %430 : vector<8x128xf32>
    %443 = arith.addf %440, %442 : vector<8x128xf32>
    %c22_i32 = arith.constant 22 : i32
    %cst_177 = arith.constant 0.000000e+00 : f32
    %444 = vector.broadcast %cst_177 : f32 to vector<8x128xf32>
    %445 = arith.maximumf %443, %444 : vector<8x128xf32>
    %cst_178 = arith.constant dense<0.000000e+00> : vector<128xf32>
    %446 = vector.multi_reduction <add>, %445, %cst_178 [0] : vector<8x128xf32> to vector<128xf32>
    %447 = vector.shape_cast %446 : vector<128xf32> to vector<1x128xf32>
    %448 = arith.index_cast %c22_i32 : i32 to index
    %c0_179 = arith.constant 0 : index
    %c0_180 = arith.constant 0 : index
    %449 = vector.load %arg2[%448, %c0_179, %c0_180] : memref<50x8x128xf32, #tpu.memory_space<vmem>>, vector<1x8x128xf32>
    %450 = vector.shape_cast %449 : vector<1x8x128xf32> to vector<8x128xf32>
    %cst_181 = arith.constant 9.990000e-01 : f32
    %451 = vector.broadcast %cst_181 : f32 to vector<8x128xf32>
    %452 = arith.mulf %443, %451 : vector<8x128xf32>
    %453 = arith.addf %452, %2 : vector<8x128xf32>
    %cst_182 = arith.constant 1.000000e-03 : f32
    %454 = vector.broadcast %cst_182 : f32 to vector<8x128xf32>
    %455 = arith.mulf %454, %445 : vector<8x128xf32>
    %456 = arith.addf %453, %455 : vector<8x128xf32>
    %cst_183 = arith.constant 1.000000e-03 : f32
    %457 = vector.broadcast %cst_183 : f32 to vector<1x128xf32>
    %458 = arith.mulf %457, %447 : vector<1x128xf32>
    %459 = vector.broadcast %458 : vector<1x128xf32> to vector<8x128xf32>
    %460 = arith.subf %456, %459 : vector<8x128xf32>
    %cst_184 = arith.constant 0.0316227749 : f32
    %461 = vector.broadcast %cst_184 : f32 to vector<8x128xf32>
    %462 = arith.mulf %461, %450 : vector<8x128xf32>
    %463 = arith.addf %460, %462 : vector<8x128xf32>
    %c23_i32 = arith.constant 23 : i32
    %cst_185 = arith.constant 0.000000e+00 : f32
    %464 = vector.broadcast %cst_185 : f32 to vector<8x128xf32>
    %465 = arith.maximumf %463, %464 : vector<8x128xf32>
    %cst_186 = arith.constant dense<0.000000e+00> : vector<128xf32>
    %466 = vector.multi_reduction <add>, %465, %cst_186 [0] : vector<8x128xf32> to vector<128xf32>
    %467 = vector.shape_cast %466 : vector<128xf32> to vector<1x128xf32>
    %468 = arith.index_cast %c23_i32 : i32 to index
    %c0_187 = arith.constant 0 : index
    %c0_188 = arith.constant 0 : index
    %469 = vector.load %arg2[%468, %c0_187, %c0_188] : memref<50x8x128xf32, #tpu.memory_space<vmem>>, vector<1x8x128xf32>
    %470 = vector.shape_cast %469 : vector<1x8x128xf32> to vector<8x128xf32>
    %cst_189 = arith.constant 9.990000e-01 : f32
    %471 = vector.broadcast %cst_189 : f32 to vector<8x128xf32>
    %472 = arith.mulf %463, %471 : vector<8x128xf32>
    %473 = arith.addf %472, %2 : vector<8x128xf32>
    %cst_190 = arith.constant 1.000000e-03 : f32
    %474 = vector.broadcast %cst_190 : f32 to vector<8x128xf32>
    %475 = arith.mulf %474, %465 : vector<8x128xf32>
    %476 = arith.addf %473, %475 : vector<8x128xf32>
    %cst_191 = arith.constant 1.000000e-03 : f32
    %477 = vector.broadcast %cst_191 : f32 to vector<1x128xf32>
    %478 = arith.mulf %477, %467 : vector<1x128xf32>
    %479 = vector.broadcast %478 : vector<1x128xf32> to vector<8x128xf32>
    %480 = arith.subf %476, %479 : vector<8x128xf32>
    %cst_192 = arith.constant 0.0316227749 : f32
    %481 = vector.broadcast %cst_192 : f32 to vector<8x128xf32>
    %482 = arith.mulf %481, %470 : vector<8x128xf32>
    %483 = arith.addf %480, %482 : vector<8x128xf32>
    %c24_i32 = arith.constant 24 : i32
    %cst_193 = arith.constant 0.000000e+00 : f32
    %484 = vector.broadcast %cst_193 : f32 to vector<8x128xf32>
    %485 = arith.maximumf %483, %484 : vector<8x128xf32>
    %cst_194 = arith.constant dense<0.000000e+00> : vector<128xf32>
    %486 = vector.multi_reduction <add>, %485, %cst_194 [0] : vector<8x128xf32> to vector<128xf32>
    %487 = vector.shape_cast %486 : vector<128xf32> to vector<1x128xf32>
    %488 = arith.index_cast %c24_i32 : i32 to index
    %c0_195 = arith.constant 0 : index
    %c0_196 = arith.constant 0 : index
    %489 = vector.load %arg2[%488, %c0_195, %c0_196] : memref<50x8x128xf32, #tpu.memory_space<vmem>>, vector<1x8x128xf32>
    %490 = vector.shape_cast %489 : vector<1x8x128xf32> to vector<8x128xf32>
    %cst_197 = arith.constant 9.990000e-01 : f32
    %491 = vector.broadcast %cst_197 : f32 to vector<8x128xf32>
    %492 = arith.mulf %483, %491 : vector<8x128xf32>
    %493 = arith.addf %492, %2 : vector<8x128xf32>
    %cst_198 = arith.constant 1.000000e-03 : f32
    %494 = vector.broadcast %cst_198 : f32 to vector<8x128xf32>
    %495 = arith.mulf %494, %485 : vector<8x128xf32>
    %496 = arith.addf %493, %495 : vector<8x128xf32>
    %cst_199 = arith.constant 1.000000e-03 : f32
    %497 = vector.broadcast %cst_199 : f32 to vector<1x128xf32>
    %498 = arith.mulf %497, %487 : vector<1x128xf32>
    %499 = vector.broadcast %498 : vector<1x128xf32> to vector<8x128xf32>
    %500 = arith.subf %496, %499 : vector<8x128xf32>
    %cst_200 = arith.constant 0.0316227749 : f32
    %501 = vector.broadcast %cst_200 : f32 to vector<8x128xf32>
    %502 = arith.mulf %501, %490 : vector<8x128xf32>
    %503 = arith.addf %500, %502 : vector<8x128xf32>
    %c25_i32 = arith.constant 25 : i32
    %cst_201 = arith.constant 0.000000e+00 : f32
    %504 = vector.broadcast %cst_201 : f32 to vector<8x128xf32>
    %505 = arith.maximumf %503, %504 : vector<8x128xf32>
    %cst_202 = arith.constant dense<0.000000e+00> : vector<128xf32>
    %506 = vector.multi_reduction <add>, %505, %cst_202 [0] : vector<8x128xf32> to vector<128xf32>
    %507 = vector.shape_cast %506 : vector<128xf32> to vector<1x128xf32>
    %508 = arith.index_cast %c25_i32 : i32 to index
    %c0_203 = arith.constant 0 : index
    %c0_204 = arith.constant 0 : index
    %509 = vector.load %arg2[%508, %c0_203, %c0_204] : memref<50x8x128xf32, #tpu.memory_space<vmem>>, vector<1x8x128xf32>
    %510 = vector.shape_cast %509 : vector<1x8x128xf32> to vector<8x128xf32>
    %cst_205 = arith.constant 9.990000e-01 : f32
    %511 = vector.broadcast %cst_205 : f32 to vector<8x128xf32>
    %512 = arith.mulf %503, %511 : vector<8x128xf32>
    %513 = arith.addf %512, %2 : vector<8x128xf32>
    %cst_206 = arith.constant 1.000000e-03 : f32
    %514 = vector.broadcast %cst_206 : f32 to vector<8x128xf32>
    %515 = arith.mulf %514, %505 : vector<8x128xf32>
    %516 = arith.addf %513, %515 : vector<8x128xf32>
    %cst_207 = arith.constant 1.000000e-03 : f32
    %517 = vector.broadcast %cst_207 : f32 to vector<1x128xf32>
    %518 = arith.mulf %517, %507 : vector<1x128xf32>
    %519 = vector.broadcast %518 : vector<1x128xf32> to vector<8x128xf32>
    %520 = arith.subf %516, %519 : vector<8x128xf32>
    %cst_208 = arith.constant 0.0316227749 : f32
    %521 = vector.broadcast %cst_208 : f32 to vector<8x128xf32>
    %522 = arith.mulf %521, %510 : vector<8x128xf32>
    %523 = arith.addf %520, %522 : vector<8x128xf32>
    %c26_i32 = arith.constant 26 : i32
    %cst_209 = arith.constant 0.000000e+00 : f32
    %524 = vector.broadcast %cst_209 : f32 to vector<8x128xf32>
    %525 = arith.maximumf %523, %524 : vector<8x128xf32>
    %cst_210 = arith.constant dense<0.000000e+00> : vector<128xf32>
    %526 = vector.multi_reduction <add>, %525, %cst_210 [0] : vector<8x128xf32> to vector<128xf32>
    %527 = vector.shape_cast %526 : vector<128xf32> to vector<1x128xf32>
    %528 = arith.index_cast %c26_i32 : i32 to index
    %c0_211 = arith.constant 0 : index
    %c0_212 = arith.constant 0 : index
    %529 = vector.load %arg2[%528, %c0_211, %c0_212] : memref<50x8x128xf32, #tpu.memory_space<vmem>>, vector<1x8x128xf32>
    %530 = vector.shape_cast %529 : vector<1x8x128xf32> to vector<8x128xf32>
    %cst_213 = arith.constant 9.990000e-01 : f32
    %531 = vector.broadcast %cst_213 : f32 to vector<8x128xf32>
    %532 = arith.mulf %523, %531 : vector<8x128xf32>
    %533 = arith.addf %532, %2 : vector<8x128xf32>
    %cst_214 = arith.constant 1.000000e-03 : f32
    %534 = vector.broadcast %cst_214 : f32 to vector<8x128xf32>
    %535 = arith.mulf %534, %525 : vector<8x128xf32>
    %536 = arith.addf %533, %535 : vector<8x128xf32>
    %cst_215 = arith.constant 1.000000e-03 : f32
    %537 = vector.broadcast %cst_215 : f32 to vector<1x128xf32>
    %538 = arith.mulf %537, %527 : vector<1x128xf32>
    %539 = vector.broadcast %538 : vector<1x128xf32> to vector<8x128xf32>
    %540 = arith.subf %536, %539 : vector<8x128xf32>
    %cst_216 = arith.constant 0.0316227749 : f32
    %541 = vector.broadcast %cst_216 : f32 to vector<8x128xf32>
    %542 = arith.mulf %541, %530 : vector<8x128xf32>
    %543 = arith.addf %540, %542 : vector<8x128xf32>
    %c27_i32 = arith.constant 27 : i32
    %cst_217 = arith.constant 0.000000e+00 : f32
    %544 = vector.broadcast %cst_217 : f32 to vector<8x128xf32>
    %545 = arith.maximumf %543, %544 : vector<8x128xf32>
    %cst_218 = arith.constant dense<0.000000e+00> : vector<128xf32>
    %546 = vector.multi_reduction <add>, %545, %cst_218 [0] : vector<8x128xf32> to vector<128xf32>
    %547 = vector.shape_cast %546 : vector<128xf32> to vector<1x128xf32>
    %548 = arith.index_cast %c27_i32 : i32 to index
    %c0_219 = arith.constant 0 : index
    %c0_220 = arith.constant 0 : index
    %549 = vector.load %arg2[%548, %c0_219, %c0_220] : memref<50x8x128xf32, #tpu.memory_space<vmem>>, vector<1x8x128xf32>
    %550 = vector.shape_cast %549 : vector<1x8x128xf32> to vector<8x128xf32>
    %cst_221 = arith.constant 9.990000e-01 : f32
    %551 = vector.broadcast %cst_221 : f32 to vector<8x128xf32>
    %552 = arith.mulf %543, %551 : vector<8x128xf32>
    %553 = arith.addf %552, %2 : vector<8x128xf32>
    %cst_222 = arith.constant 1.000000e-03 : f32
    %554 = vector.broadcast %cst_222 : f32 to vector<8x128xf32>
    %555 = arith.mulf %554, %545 : vector<8x128xf32>
    %556 = arith.addf %553, %555 : vector<8x128xf32>
    %cst_223 = arith.constant 1.000000e-03 : f32
    %557 = vector.broadcast %cst_223 : f32 to vector<1x128xf32>
    %558 = arith.mulf %557, %547 : vector<1x128xf32>
    %559 = vector.broadcast %558 : vector<1x128xf32> to vector<8x128xf32>
    %560 = arith.subf %556, %559 : vector<8x128xf32>
    %cst_224 = arith.constant 0.0316227749 : f32
    %561 = vector.broadcast %cst_224 : f32 to vector<8x128xf32>
    %562 = arith.mulf %561, %550 : vector<8x128xf32>
    %563 = arith.addf %560, %562 : vector<8x128xf32>
    %c28_i32 = arith.constant 28 : i32
    %cst_225 = arith.constant 0.000000e+00 : f32
    %564 = vector.broadcast %cst_225 : f32 to vector<8x128xf32>
    %565 = arith.maximumf %563, %564 : vector<8x128xf32>
    %cst_226 = arith.constant dense<0.000000e+00> : vector<128xf32>
    %566 = vector.multi_reduction <add>, %565, %cst_226 [0] : vector<8x128xf32> to vector<128xf32>
    %567 = vector.shape_cast %566 : vector<128xf32> to vector<1x128xf32>
    %568 = arith.index_cast %c28_i32 : i32 to index
    %c0_227 = arith.constant 0 : index
    %c0_228 = arith.constant 0 : index
    %569 = vector.load %arg2[%568, %c0_227, %c0_228] : memref<50x8x128xf32, #tpu.memory_space<vmem>>, vector<1x8x128xf32>
    %570 = vector.shape_cast %569 : vector<1x8x128xf32> to vector<8x128xf32>
    %cst_229 = arith.constant 9.990000e-01 : f32
    %571 = vector.broadcast %cst_229 : f32 to vector<8x128xf32>
    %572 = arith.mulf %563, %571 : vector<8x128xf32>
    %573 = arith.addf %572, %2 : vector<8x128xf32>
    %cst_230 = arith.constant 1.000000e-03 : f32
    %574 = vector.broadcast %cst_230 : f32 to vector<8x128xf32>
    %575 = arith.mulf %574, %565 : vector<8x128xf32>
    %576 = arith.addf %573, %575 : vector<8x128xf32>
    %cst_231 = arith.constant 1.000000e-03 : f32
    %577 = vector.broadcast %cst_231 : f32 to vector<1x128xf32>
    %578 = arith.mulf %577, %567 : vector<1x128xf32>
    %579 = vector.broadcast %578 : vector<1x128xf32> to vector<8x128xf32>
    %580 = arith.subf %576, %579 : vector<8x128xf32>
    %cst_232 = arith.constant 0.0316227749 : f32
    %581 = vector.broadcast %cst_232 : f32 to vector<8x128xf32>
    %582 = arith.mulf %581, %570 : vector<8x128xf32>
    %583 = arith.addf %580, %582 : vector<8x128xf32>
    %c29_i32 = arith.constant 29 : i32
    %cst_233 = arith.constant 0.000000e+00 : f32
    %584 = vector.broadcast %cst_233 : f32 to vector<8x128xf32>
    %585 = arith.maximumf %583, %584 : vector<8x128xf32>
    %cst_234 = arith.constant dense<0.000000e+00> : vector<128xf32>
    %586 = vector.multi_reduction <add>, %585, %cst_234 [0] : vector<8x128xf32> to vector<128xf32>
    %587 = vector.shape_cast %586 : vector<128xf32> to vector<1x128xf32>
    %588 = arith.index_cast %c29_i32 : i32 to index
    %c0_235 = arith.constant 0 : index
    %c0_236 = arith.constant 0 : index
    %589 = vector.load %arg2[%588, %c0_235, %c0_236] : memref<50x8x128xf32, #tpu.memory_space<vmem>>, vector<1x8x128xf32>
    %590 = vector.shape_cast %589 : vector<1x8x128xf32> to vector<8x128xf32>
    %cst_237 = arith.constant 9.990000e-01 : f32
    %591 = vector.broadcast %cst_237 : f32 to vector<8x128xf32>
    %592 = arith.mulf %583, %591 : vector<8x128xf32>
    %593 = arith.addf %592, %2 : vector<8x128xf32>
    %cst_238 = arith.constant 1.000000e-03 : f32
    %594 = vector.broadcast %cst_238 : f32 to vector<8x128xf32>
    %595 = arith.mulf %594, %585 : vector<8x128xf32>
    %596 = arith.addf %593, %595 : vector<8x128xf32>
    %cst_239 = arith.constant 1.000000e-03 : f32
    %597 = vector.broadcast %cst_239 : f32 to vector<1x128xf32>
    %598 = arith.mulf %597, %587 : vector<1x128xf32>
    %599 = vector.broadcast %598 : vector<1x128xf32> to vector<8x128xf32>
    %600 = arith.subf %596, %599 : vector<8x128xf32>
    %cst_240 = arith.constant 0.0316227749 : f32
    %601 = vector.broadcast %cst_240 : f32 to vector<8x128xf32>
    %602 = arith.mulf %601, %590 : vector<8x128xf32>
    %603 = arith.addf %600, %602 : vector<8x128xf32>
    %c30_i32 = arith.constant 30 : i32
    %cst_241 = arith.constant 0.000000e+00 : f32
    %604 = vector.broadcast %cst_241 : f32 to vector<8x128xf32>
    %605 = arith.maximumf %603, %604 : vector<8x128xf32>
    %cst_242 = arith.constant dense<0.000000e+00> : vector<128xf32>
    %606 = vector.multi_reduction <add>, %605, %cst_242 [0] : vector<8x128xf32> to vector<128xf32>
    %607 = vector.shape_cast %606 : vector<128xf32> to vector<1x128xf32>
    %608 = arith.index_cast %c30_i32 : i32 to index
    %c0_243 = arith.constant 0 : index
    %c0_244 = arith.constant 0 : index
    %609 = vector.load %arg2[%608, %c0_243, %c0_244] : memref<50x8x128xf32, #tpu.memory_space<vmem>>, vector<1x8x128xf32>
    %610 = vector.shape_cast %609 : vector<1x8x128xf32> to vector<8x128xf32>
    %cst_245 = arith.constant 9.990000e-01 : f32
    %611 = vector.broadcast %cst_245 : f32 to vector<8x128xf32>
    %612 = arith.mulf %603, %611 : vector<8x128xf32>
    %613 = arith.addf %612, %2 : vector<8x128xf32>
    %cst_246 = arith.constant 1.000000e-03 : f32
    %614 = vector.broadcast %cst_246 : f32 to vector<8x128xf32>
    %615 = arith.mulf %614, %605 : vector<8x128xf32>
    %616 = arith.addf %613, %615 : vector<8x128xf32>
    %cst_247 = arith.constant 1.000000e-03 : f32
    %617 = vector.broadcast %cst_247 : f32 to vector<1x128xf32>
    %618 = arith.mulf %617, %607 : vector<1x128xf32>
    %619 = vector.broadcast %618 : vector<1x128xf32> to vector<8x128xf32>
    %620 = arith.subf %616, %619 : vector<8x128xf32>
    %cst_248 = arith.constant 0.0316227749 : f32
    %621 = vector.broadcast %cst_248 : f32 to vector<8x128xf32>
    %622 = arith.mulf %621, %610 : vector<8x128xf32>
    %623 = arith.addf %620, %622 : vector<8x128xf32>
    %c31_i32 = arith.constant 31 : i32
    %cst_249 = arith.constant 0.000000e+00 : f32
    %624 = vector.broadcast %cst_249 : f32 to vector<8x128xf32>
    %625 = arith.maximumf %623, %624 : vector<8x128xf32>
    %cst_250 = arith.constant dense<0.000000e+00> : vector<128xf32>
    %626 = vector.multi_reduction <add>, %625, %cst_250 [0] : vector<8x128xf32> to vector<128xf32>
    %627 = vector.shape_cast %626 : vector<128xf32> to vector<1x128xf32>
    %628 = arith.index_cast %c31_i32 : i32 to index
    %c0_251 = arith.constant 0 : index
    %c0_252 = arith.constant 0 : index
    %629 = vector.load %arg2[%628, %c0_251, %c0_252] : memref<50x8x128xf32, #tpu.memory_space<vmem>>, vector<1x8x128xf32>
    %630 = vector.shape_cast %629 : vector<1x8x128xf32> to vector<8x128xf32>
    %cst_253 = arith.constant 9.990000e-01 : f32
    %631 = vector.broadcast %cst_253 : f32 to vector<8x128xf32>
    %632 = arith.mulf %623, %631 : vector<8x128xf32>
    %633 = arith.addf %632, %2 : vector<8x128xf32>
    %cst_254 = arith.constant 1.000000e-03 : f32
    %634 = vector.broadcast %cst_254 : f32 to vector<8x128xf32>
    %635 = arith.mulf %634, %625 : vector<8x128xf32>
    %636 = arith.addf %633, %635 : vector<8x128xf32>
    %cst_255 = arith.constant 1.000000e-03 : f32
    %637 = vector.broadcast %cst_255 : f32 to vector<1x128xf32>
    %638 = arith.mulf %637, %627 : vector<1x128xf32>
    %639 = vector.broadcast %638 : vector<1x128xf32> to vector<8x128xf32>
    %640 = arith.subf %636, %639 : vector<8x128xf32>
    %cst_256 = arith.constant 0.0316227749 : f32
    %641 = vector.broadcast %cst_256 : f32 to vector<8x128xf32>
    %642 = arith.mulf %641, %630 : vector<8x128xf32>
    %643 = arith.addf %640, %642 : vector<8x128xf32>
    %c32_i32 = arith.constant 32 : i32
    %cst_257 = arith.constant 0.000000e+00 : f32
    %644 = vector.broadcast %cst_257 : f32 to vector<8x128xf32>
    %645 = arith.maximumf %643, %644 : vector<8x128xf32>
    %cst_258 = arith.constant dense<0.000000e+00> : vector<128xf32>
    %646 = vector.multi_reduction <add>, %645, %cst_258 [0] : vector<8x128xf32> to vector<128xf32>
    %647 = vector.shape_cast %646 : vector<128xf32> to vector<1x128xf32>
    %648 = arith.index_cast %c32_i32 : i32 to index
    %c0_259 = arith.constant 0 : index
    %c0_260 = arith.constant 0 : index
    %649 = vector.load %arg2[%648, %c0_259, %c0_260] : memref<50x8x128xf32, #tpu.memory_space<vmem>>, vector<1x8x128xf32>
    %650 = vector.shape_cast %649 : vector<1x8x128xf32> to vector<8x128xf32>
    %cst_261 = arith.constant 9.990000e-01 : f32
    %651 = vector.broadcast %cst_261 : f32 to vector<8x128xf32>
    %652 = arith.mulf %643, %651 : vector<8x128xf32>
    %653 = arith.addf %652, %2 : vector<8x128xf32>
    %cst_262 = arith.constant 1.000000e-03 : f32
    %654 = vector.broadcast %cst_262 : f32 to vector<8x128xf32>
    %655 = arith.mulf %654, %645 : vector<8x128xf32>
    %656 = arith.addf %653, %655 : vector<8x128xf32>
    %cst_263 = arith.constant 1.000000e-03 : f32
    %657 = vector.broadcast %cst_263 : f32 to vector<1x128xf32>
    %658 = arith.mulf %657, %647 : vector<1x128xf32>
    %659 = vector.broadcast %658 : vector<1x128xf32> to vector<8x128xf32>
    %660 = arith.subf %656, %659 : vector<8x128xf32>
    %cst_264 = arith.constant 0.0316227749 : f32
    %661 = vector.broadcast %cst_264 : f32 to vector<8x128xf32>
    %662 = arith.mulf %661, %650 : vector<8x128xf32>
    %663 = arith.addf %660, %662 : vector<8x128xf32>
    %c33_i32 = arith.constant 33 : i32
    %cst_265 = arith.constant 0.000000e+00 : f32
    %664 = vector.broadcast %cst_265 : f32 to vector<8x128xf32>
    %665 = arith.maximumf %663, %664 : vector<8x128xf32>
    %cst_266 = arith.constant dense<0.000000e+00> : vector<128xf32>
    %666 = vector.multi_reduction <add>, %665, %cst_266 [0] : vector<8x128xf32> to vector<128xf32>
    %667 = vector.shape_cast %666 : vector<128xf32> to vector<1x128xf32>
    %668 = arith.index_cast %c33_i32 : i32 to index
    %c0_267 = arith.constant 0 : index
    %c0_268 = arith.constant 0 : index
    %669 = vector.load %arg2[%668, %c0_267, %c0_268] : memref<50x8x128xf32, #tpu.memory_space<vmem>>, vector<1x8x128xf32>
    %670 = vector.shape_cast %669 : vector<1x8x128xf32> to vector<8x128xf32>
    %cst_269 = arith.constant 9.990000e-01 : f32
    %671 = vector.broadcast %cst_269 : f32 to vector<8x128xf32>
    %672 = arith.mulf %663, %671 : vector<8x128xf32>
    %673 = arith.addf %672, %2 : vector<8x128xf32>
    %cst_270 = arith.constant 1.000000e-03 : f32
    %674 = vector.broadcast %cst_270 : f32 to vector<8x128xf32>
    %675 = arith.mulf %674, %665 : vector<8x128xf32>
    %676 = arith.addf %673, %675 : vector<8x128xf32>
    %cst_271 = arith.constant 1.000000e-03 : f32
    %677 = vector.broadcast %cst_271 : f32 to vector<1x128xf32>
    %678 = arith.mulf %677, %667 : vector<1x128xf32>
    %679 = vector.broadcast %678 : vector<1x128xf32> to vector<8x128xf32>
    %680 = arith.subf %676, %679 : vector<8x128xf32>
    %cst_272 = arith.constant 0.0316227749 : f32
    %681 = vector.broadcast %cst_272 : f32 to vector<8x128xf32>
    %682 = arith.mulf %681, %670 : vector<8x128xf32>
    %683 = arith.addf %680, %682 : vector<8x128xf32>
    %c34_i32 = arith.constant 34 : i32
    %cst_273 = arith.constant 0.000000e+00 : f32
    %684 = vector.broadcast %cst_273 : f32 to vector<8x128xf32>
    %685 = arith.maximumf %683, %684 : vector<8x128xf32>
    %cst_274 = arith.constant dense<0.000000e+00> : vector<128xf32>
    %686 = vector.multi_reduction <add>, %685, %cst_274 [0] : vector<8x128xf32> to vector<128xf32>
    %687 = vector.shape_cast %686 : vector<128xf32> to vector<1x128xf32>
    %688 = arith.index_cast %c34_i32 : i32 to index
    %c0_275 = arith.constant 0 : index
    %c0_276 = arith.constant 0 : index
    %689 = vector.load %arg2[%688, %c0_275, %c0_276] : memref<50x8x128xf32, #tpu.memory_space<vmem>>, vector<1x8x128xf32>
    %690 = vector.shape_cast %689 : vector<1x8x128xf32> to vector<8x128xf32>
    %cst_277 = arith.constant 9.990000e-01 : f32
    %691 = vector.broadcast %cst_277 : f32 to vector<8x128xf32>
    %692 = arith.mulf %683, %691 : vector<8x128xf32>
    %693 = arith.addf %692, %2 : vector<8x128xf32>
    %cst_278 = arith.constant 1.000000e-03 : f32
    %694 = vector.broadcast %cst_278 : f32 to vector<8x128xf32>
    %695 = arith.mulf %694, %685 : vector<8x128xf32>
    %696 = arith.addf %693, %695 : vector<8x128xf32>
    %cst_279 = arith.constant 1.000000e-03 : f32
    %697 = vector.broadcast %cst_279 : f32 to vector<1x128xf32>
    %698 = arith.mulf %697, %687 : vector<1x128xf32>
    %699 = vector.broadcast %698 : vector<1x128xf32> to vector<8x128xf32>
    %700 = arith.subf %696, %699 : vector<8x128xf32>
    %cst_280 = arith.constant 0.0316227749 : f32
    %701 = vector.broadcast %cst_280 : f32 to vector<8x128xf32>
    %702 = arith.mulf %701, %690 : vector<8x128xf32>
    %703 = arith.addf %700, %702 : vector<8x128xf32>
    %c35_i32 = arith.constant 35 : i32
    %cst_281 = arith.constant 0.000000e+00 : f32
    %704 = vector.broadcast %cst_281 : f32 to vector<8x128xf32>
    %705 = arith.maximumf %703, %704 : vector<8x128xf32>
    %cst_282 = arith.constant dense<0.000000e+00> : vector<128xf32>
    %706 = vector.multi_reduction <add>, %705, %cst_282 [0] : vector<8x128xf32> to vector<128xf32>
    %707 = vector.shape_cast %706 : vector<128xf32> to vector<1x128xf32>
    %708 = arith.index_cast %c35_i32 : i32 to index
    %c0_283 = arith.constant 0 : index
    %c0_284 = arith.constant 0 : index
    %709 = vector.load %arg2[%708, %c0_283, %c0_284] : memref<50x8x128xf32, #tpu.memory_space<vmem>>, vector<1x8x128xf32>
    %710 = vector.shape_cast %709 : vector<1x8x128xf32> to vector<8x128xf32>
    %cst_285 = arith.constant 9.990000e-01 : f32
    %711 = vector.broadcast %cst_285 : f32 to vector<8x128xf32>
    %712 = arith.mulf %703, %711 : vector<8x128xf32>
    %713 = arith.addf %712, %2 : vector<8x128xf32>
    %cst_286 = arith.constant 1.000000e-03 : f32
    %714 = vector.broadcast %cst_286 : f32 to vector<8x128xf32>
    %715 = arith.mulf %714, %705 : vector<8x128xf32>
    %716 = arith.addf %713, %715 : vector<8x128xf32>
    %cst_287 = arith.constant 1.000000e-03 : f32
    %717 = vector.broadcast %cst_287 : f32 to vector<1x128xf32>
    %718 = arith.mulf %717, %707 : vector<1x128xf32>
    %719 = vector.broadcast %718 : vector<1x128xf32> to vector<8x128xf32>
    %720 = arith.subf %716, %719 : vector<8x128xf32>
    %cst_288 = arith.constant 0.0316227749 : f32
    %721 = vector.broadcast %cst_288 : f32 to vector<8x128xf32>
    %722 = arith.mulf %721, %710 : vector<8x128xf32>
    %723 = arith.addf %720, %722 : vector<8x128xf32>
    %c36_i32 = arith.constant 36 : i32
    %cst_289 = arith.constant 0.000000e+00 : f32
    %724 = vector.broadcast %cst_289 : f32 to vector<8x128xf32>
    %725 = arith.maximumf %723, %724 : vector<8x128xf32>
    %cst_290 = arith.constant dense<0.000000e+00> : vector<128xf32>
    %726 = vector.multi_reduction <add>, %725, %cst_290 [0] : vector<8x128xf32> to vector<128xf32>
    %727 = vector.shape_cast %726 : vector<128xf32> to vector<1x128xf32>
    %728 = arith.index_cast %c36_i32 : i32 to index
    %c0_291 = arith.constant 0 : index
    %c0_292 = arith.constant 0 : index
    %729 = vector.load %arg2[%728, %c0_291, %c0_292] : memref<50x8x128xf32, #tpu.memory_space<vmem>>, vector<1x8x128xf32>
    %730 = vector.shape_cast %729 : vector<1x8x128xf32> to vector<8x128xf32>
    %cst_293 = arith.constant 9.990000e-01 : f32
    %731 = vector.broadcast %cst_293 : f32 to vector<8x128xf32>
    %732 = arith.mulf %723, %731 : vector<8x128xf32>
    %733 = arith.addf %732, %2 : vector<8x128xf32>
    %cst_294 = arith.constant 1.000000e-03 : f32
    %734 = vector.broadcast %cst_294 : f32 to vector<8x128xf32>
    %735 = arith.mulf %734, %725 : vector<8x128xf32>
    %736 = arith.addf %733, %735 : vector<8x128xf32>
    %cst_295 = arith.constant 1.000000e-03 : f32
    %737 = vector.broadcast %cst_295 : f32 to vector<1x128xf32>
    %738 = arith.mulf %737, %727 : vector<1x128xf32>
    %739 = vector.broadcast %738 : vector<1x128xf32> to vector<8x128xf32>
    %740 = arith.subf %736, %739 : vector<8x128xf32>
    %cst_296 = arith.constant 0.0316227749 : f32
    %741 = vector.broadcast %cst_296 : f32 to vector<8x128xf32>
    %742 = arith.mulf %741, %730 : vector<8x128xf32>
    %743 = arith.addf %740, %742 : vector<8x128xf32>
    %c37_i32 = arith.constant 37 : i32
    %cst_297 = arith.constant 0.000000e+00 : f32
    %744 = vector.broadcast %cst_297 : f32 to vector<8x128xf32>
    %745 = arith.maximumf %743, %744 : vector<8x128xf32>
    %cst_298 = arith.constant dense<0.000000e+00> : vector<128xf32>
    %746 = vector.multi_reduction <add>, %745, %cst_298 [0] : vector<8x128xf32> to vector<128xf32>
    %747 = vector.shape_cast %746 : vector<128xf32> to vector<1x128xf32>
    %748 = arith.index_cast %c37_i32 : i32 to index
    %c0_299 = arith.constant 0 : index
    %c0_300 = arith.constant 0 : index
    %749 = vector.load %arg2[%748, %c0_299, %c0_300] : memref<50x8x128xf32, #tpu.memory_space<vmem>>, vector<1x8x128xf32>
    %750 = vector.shape_cast %749 : vector<1x8x128xf32> to vector<8x128xf32>
    %cst_301 = arith.constant 9.990000e-01 : f32
    %751 = vector.broadcast %cst_301 : f32 to vector<8x128xf32>
    %752 = arith.mulf %743, %751 : vector<8x128xf32>
    %753 = arith.addf %752, %2 : vector<8x128xf32>
    %cst_302 = arith.constant 1.000000e-03 : f32
    %754 = vector.broadcast %cst_302 : f32 to vector<8x128xf32>
    %755 = arith.mulf %754, %745 : vector<8x128xf32>
    %756 = arith.addf %753, %755 : vector<8x128xf32>
    %cst_303 = arith.constant 1.000000e-03 : f32
    %757 = vector.broadcast %cst_303 : f32 to vector<1x128xf32>
    %758 = arith.mulf %757, %747 : vector<1x128xf32>
    %759 = vector.broadcast %758 : vector<1x128xf32> to vector<8x128xf32>
    %760 = arith.subf %756, %759 : vector<8x128xf32>
    %cst_304 = arith.constant 0.0316227749 : f32
    %761 = vector.broadcast %cst_304 : f32 to vector<8x128xf32>
    %762 = arith.mulf %761, %750 : vector<8x128xf32>
    %763 = arith.addf %760, %762 : vector<8x128xf32>
    %c38_i32 = arith.constant 38 : i32
    %cst_305 = arith.constant 0.000000e+00 : f32
    %764 = vector.broadcast %cst_305 : f32 to vector<8x128xf32>
    %765 = arith.maximumf %763, %764 : vector<8x128xf32>
    %cst_306 = arith.constant dense<0.000000e+00> : vector<128xf32>
    %766 = vector.multi_reduction <add>, %765, %cst_306 [0] : vector<8x128xf32> to vector<128xf32>
    %767 = vector.shape_cast %766 : vector<128xf32> to vector<1x128xf32>
    %768 = arith.index_cast %c38_i32 : i32 to index
    %c0_307 = arith.constant 0 : index
    %c0_308 = arith.constant 0 : index
    %769 = vector.load %arg2[%768, %c0_307, %c0_308] : memref<50x8x128xf32, #tpu.memory_space<vmem>>, vector<1x8x128xf32>
    %770 = vector.shape_cast %769 : vector<1x8x128xf32> to vector<8x128xf32>
    %cst_309 = arith.constant 9.990000e-01 : f32
    %771 = vector.broadcast %cst_309 : f32 to vector<8x128xf32>
    %772 = arith.mulf %763, %771 : vector<8x128xf32>
    %773 = arith.addf %772, %2 : vector<8x128xf32>
    %cst_310 = arith.constant 1.000000e-03 : f32
    %774 = vector.broadcast %cst_310 : f32 to vector<8x128xf32>
    %775 = arith.mulf %774, %765 : vector<8x128xf32>
    %776 = arith.addf %773, %775 : vector<8x128xf32>
    %cst_311 = arith.constant 1.000000e-03 : f32
    %777 = vector.broadcast %cst_311 : f32 to vector<1x128xf32>
    %778 = arith.mulf %777, %767 : vector<1x128xf32>
    %779 = vector.broadcast %778 : vector<1x128xf32> to vector<8x128xf32>
    %780 = arith.subf %776, %779 : vector<8x128xf32>
    %cst_312 = arith.constant 0.0316227749 : f32
    %781 = vector.broadcast %cst_312 : f32 to vector<8x128xf32>
    %782 = arith.mulf %781, %770 : vector<8x128xf32>
    %783 = arith.addf %780, %782 : vector<8x128xf32>
    %c39_i32 = arith.constant 39 : i32
    %cst_313 = arith.constant 0.000000e+00 : f32
    %784 = vector.broadcast %cst_313 : f32 to vector<8x128xf32>
    %785 = arith.maximumf %783, %784 : vector<8x128xf32>
    %cst_314 = arith.constant dense<0.000000e+00> : vector<128xf32>
    %786 = vector.multi_reduction <add>, %785, %cst_314 [0] : vector<8x128xf32> to vector<128xf32>
    %787 = vector.shape_cast %786 : vector<128xf32> to vector<1x128xf32>
    %788 = arith.index_cast %c39_i32 : i32 to index
    %c0_315 = arith.constant 0 : index
    %c0_316 = arith.constant 0 : index
    %789 = vector.load %arg2[%788, %c0_315, %c0_316] : memref<50x8x128xf32, #tpu.memory_space<vmem>>, vector<1x8x128xf32>
    %790 = vector.shape_cast %789 : vector<1x8x128xf32> to vector<8x128xf32>
    %cst_317 = arith.constant 9.990000e-01 : f32
    %791 = vector.broadcast %cst_317 : f32 to vector<8x128xf32>
    %792 = arith.mulf %783, %791 : vector<8x128xf32>
    %793 = arith.addf %792, %2 : vector<8x128xf32>
    %cst_318 = arith.constant 1.000000e-03 : f32
    %794 = vector.broadcast %cst_318 : f32 to vector<8x128xf32>
    %795 = arith.mulf %794, %785 : vector<8x128xf32>
    %796 = arith.addf %793, %795 : vector<8x128xf32>
    %cst_319 = arith.constant 1.000000e-03 : f32
    %797 = vector.broadcast %cst_319 : f32 to vector<1x128xf32>
    %798 = arith.mulf %797, %787 : vector<1x128xf32>
    %799 = vector.broadcast %798 : vector<1x128xf32> to vector<8x128xf32>
    %800 = arith.subf %796, %799 : vector<8x128xf32>
    %cst_320 = arith.constant 0.0316227749 : f32
    %801 = vector.broadcast %cst_320 : f32 to vector<8x128xf32>
    %802 = arith.mulf %801, %790 : vector<8x128xf32>
    %803 = arith.addf %800, %802 : vector<8x128xf32>
    %c40_i32 = arith.constant 40 : i32
    %cst_321 = arith.constant 0.000000e+00 : f32
    %804 = vector.broadcast %cst_321 : f32 to vector<8x128xf32>
    %805 = arith.maximumf %803, %804 : vector<8x128xf32>
    %cst_322 = arith.constant dense<0.000000e+00> : vector<128xf32>
    %806 = vector.multi_reduction <add>, %805, %cst_322 [0] : vector<8x128xf32> to vector<128xf32>
    %807 = vector.shape_cast %806 : vector<128xf32> to vector<1x128xf32>
    %808 = arith.index_cast %c40_i32 : i32 to index
    %c0_323 = arith.constant 0 : index
    %c0_324 = arith.constant 0 : index
    %809 = vector.load %arg2[%808, %c0_323, %c0_324] : memref<50x8x128xf32, #tpu.memory_space<vmem>>, vector<1x8x128xf32>
    %810 = vector.shape_cast %809 : vector<1x8x128xf32> to vector<8x128xf32>
    %cst_325 = arith.constant 9.990000e-01 : f32
    %811 = vector.broadcast %cst_325 : f32 to vector<8x128xf32>
    %812 = arith.mulf %803, %811 : vector<8x128xf32>
    %813 = arith.addf %812, %2 : vector<8x128xf32>
    %cst_326 = arith.constant 1.000000e-03 : f32
    %814 = vector.broadcast %cst_326 : f32 to vector<8x128xf32>
    %815 = arith.mulf %814, %805 : vector<8x128xf32>
    %816 = arith.addf %813, %815 : vector<8x128xf32>
    %cst_327 = arith.constant 1.000000e-03 : f32
    %817 = vector.broadcast %cst_327 : f32 to vector<1x128xf32>
    %818 = arith.mulf %817, %807 : vector<1x128xf32>
    %819 = vector.broadcast %818 : vector<1x128xf32> to vector<8x128xf32>
    %820 = arith.subf %816, %819 : vector<8x128xf32>
    %cst_328 = arith.constant 0.0316227749 : f32
    %821 = vector.broadcast %cst_328 : f32 to vector<8x128xf32>
    %822 = arith.mulf %821, %810 : vector<8x128xf32>
    %823 = arith.addf %820, %822 : vector<8x128xf32>
    %c41_i32 = arith.constant 41 : i32
    %cst_329 = arith.constant 0.000000e+00 : f32
    %824 = vector.broadcast %cst_329 : f32 to vector<8x128xf32>
    %825 = arith.maximumf %823, %824 : vector<8x128xf32>
    %cst_330 = arith.constant dense<0.000000e+00> : vector<128xf32>
    %826 = vector.multi_reduction <add>, %825, %cst_330 [0] : vector<8x128xf32> to vector<128xf32>
    %827 = vector.shape_cast %826 : vector<128xf32> to vector<1x128xf32>
    %828 = arith.index_cast %c41_i32 : i32 to index
    %c0_331 = arith.constant 0 : index
    %c0_332 = arith.constant 0 : index
    %829 = vector.load %arg2[%828, %c0_331, %c0_332] : memref<50x8x128xf32, #tpu.memory_space<vmem>>, vector<1x8x128xf32>
    %830 = vector.shape_cast %829 : vector<1x8x128xf32> to vector<8x128xf32>
    %cst_333 = arith.constant 9.990000e-01 : f32
    %831 = vector.broadcast %cst_333 : f32 to vector<8x128xf32>
    %832 = arith.mulf %823, %831 : vector<8x128xf32>
    %833 = arith.addf %832, %2 : vector<8x128xf32>
    %cst_334 = arith.constant 1.000000e-03 : f32
    %834 = vector.broadcast %cst_334 : f32 to vector<8x128xf32>
    %835 = arith.mulf %834, %825 : vector<8x128xf32>
    %836 = arith.addf %833, %835 : vector<8x128xf32>
    %cst_335 = arith.constant 1.000000e-03 : f32
    %837 = vector.broadcast %cst_335 : f32 to vector<1x128xf32>
    %838 = arith.mulf %837, %827 : vector<1x128xf32>
    %839 = vector.broadcast %838 : vector<1x128xf32> to vector<8x128xf32>
    %840 = arith.subf %836, %839 : vector<8x128xf32>
    %cst_336 = arith.constant 0.0316227749 : f32
    %841 = vector.broadcast %cst_336 : f32 to vector<8x128xf32>
    %842 = arith.mulf %841, %830 : vector<8x128xf32>
    %843 = arith.addf %840, %842 : vector<8x128xf32>
    %c42_i32 = arith.constant 42 : i32
    %cst_337 = arith.constant 0.000000e+00 : f32
    %844 = vector.broadcast %cst_337 : f32 to vector<8x128xf32>
    %845 = arith.maximumf %843, %844 : vector<8x128xf32>
    %cst_338 = arith.constant dense<0.000000e+00> : vector<128xf32>
    %846 = vector.multi_reduction <add>, %845, %cst_338 [0] : vector<8x128xf32> to vector<128xf32>
    %847 = vector.shape_cast %846 : vector<128xf32> to vector<1x128xf32>
    %848 = arith.index_cast %c42_i32 : i32 to index
    %c0_339 = arith.constant 0 : index
    %c0_340 = arith.constant 0 : index
    %849 = vector.load %arg2[%848, %c0_339, %c0_340] : memref<50x8x128xf32, #tpu.memory_space<vmem>>, vector<1x8x128xf32>
    %850 = vector.shape_cast %849 : vector<1x8x128xf32> to vector<8x128xf32>
    %cst_341 = arith.constant 9.990000e-01 : f32
    %851 = vector.broadcast %cst_341 : f32 to vector<8x128xf32>
    %852 = arith.mulf %843, %851 : vector<8x128xf32>
    %853 = arith.addf %852, %2 : vector<8x128xf32>
    %cst_342 = arith.constant 1.000000e-03 : f32
    %854 = vector.broadcast %cst_342 : f32 to vector<8x128xf32>
    %855 = arith.mulf %854, %845 : vector<8x128xf32>
    %856 = arith.addf %853, %855 : vector<8x128xf32>
    %cst_343 = arith.constant 1.000000e-03 : f32
    %857 = vector.broadcast %cst_343 : f32 to vector<1x128xf32>
    %858 = arith.mulf %857, %847 : vector<1x128xf32>
    %859 = vector.broadcast %858 : vector<1x128xf32> to vector<8x128xf32>
    %860 = arith.subf %856, %859 : vector<8x128xf32>
    %cst_344 = arith.constant 0.0316227749 : f32
    %861 = vector.broadcast %cst_344 : f32 to vector<8x128xf32>
    %862 = arith.mulf %861, %850 : vector<8x128xf32>
    %863 = arith.addf %860, %862 : vector<8x128xf32>
    %c43_i32 = arith.constant 43 : i32
    %cst_345 = arith.constant 0.000000e+00 : f32
    %864 = vector.broadcast %cst_345 : f32 to vector<8x128xf32>
    %865 = arith.maximumf %863, %864 : vector<8x128xf32>
    %cst_346 = arith.constant dense<0.000000e+00> : vector<128xf32>
    %866 = vector.multi_reduction <add>, %865, %cst_346 [0] : vector<8x128xf32> to vector<128xf32>
    %867 = vector.shape_cast %866 : vector<128xf32> to vector<1x128xf32>
    %868 = arith.index_cast %c43_i32 : i32 to index
    %c0_347 = arith.constant 0 : index
    %c0_348 = arith.constant 0 : index
    %869 = vector.load %arg2[%868, %c0_347, %c0_348] : memref<50x8x128xf32, #tpu.memory_space<vmem>>, vector<1x8x128xf32>
    %870 = vector.shape_cast %869 : vector<1x8x128xf32> to vector<8x128xf32>
    %cst_349 = arith.constant 9.990000e-01 : f32
    %871 = vector.broadcast %cst_349 : f32 to vector<8x128xf32>
    %872 = arith.mulf %863, %871 : vector<8x128xf32>
    %873 = arith.addf %872, %2 : vector<8x128xf32>
    %cst_350 = arith.constant 1.000000e-03 : f32
    %874 = vector.broadcast %cst_350 : f32 to vector<8x128xf32>
    %875 = arith.mulf %874, %865 : vector<8x128xf32>
    %876 = arith.addf %873, %875 : vector<8x128xf32>
    %cst_351 = arith.constant 1.000000e-03 : f32
    %877 = vector.broadcast %cst_351 : f32 to vector<1x128xf32>
    %878 = arith.mulf %877, %867 : vector<1x128xf32>
    %879 = vector.broadcast %878 : vector<1x128xf32> to vector<8x128xf32>
    %880 = arith.subf %876, %879 : vector<8x128xf32>
    %cst_352 = arith.constant 0.0316227749 : f32
    %881 = vector.broadcast %cst_352 : f32 to vector<8x128xf32>
    %882 = arith.mulf %881, %870 : vector<8x128xf32>
    %883 = arith.addf %880, %882 : vector<8x128xf32>
    %c44_i32 = arith.constant 44 : i32
    %cst_353 = arith.constant 0.000000e+00 : f32
    %884 = vector.broadcast %cst_353 : f32 to vector<8x128xf32>
    %885 = arith.maximumf %883, %884 : vector<8x128xf32>
    %cst_354 = arith.constant dense<0.000000e+00> : vector<128xf32>
    %886 = vector.multi_reduction <add>, %885, %cst_354 [0] : vector<8x128xf32> to vector<128xf32>
    %887 = vector.shape_cast %886 : vector<128xf32> to vector<1x128xf32>
    %888 = arith.index_cast %c44_i32 : i32 to index
    %c0_355 = arith.constant 0 : index
    %c0_356 = arith.constant 0 : index
    %889 = vector.load %arg2[%888, %c0_355, %c0_356] : memref<50x8x128xf32, #tpu.memory_space<vmem>>, vector<1x8x128xf32>
    %890 = vector.shape_cast %889 : vector<1x8x128xf32> to vector<8x128xf32>
    %cst_357 = arith.constant 9.990000e-01 : f32
    %891 = vector.broadcast %cst_357 : f32 to vector<8x128xf32>
    %892 = arith.mulf %883, %891 : vector<8x128xf32>
    %893 = arith.addf %892, %2 : vector<8x128xf32>
    %cst_358 = arith.constant 1.000000e-03 : f32
    %894 = vector.broadcast %cst_358 : f32 to vector<8x128xf32>
    %895 = arith.mulf %894, %885 : vector<8x128xf32>
    %896 = arith.addf %893, %895 : vector<8x128xf32>
    %cst_359 = arith.constant 1.000000e-03 : f32
    %897 = vector.broadcast %cst_359 : f32 to vector<1x128xf32>
    %898 = arith.mulf %897, %887 : vector<1x128xf32>
    %899 = vector.broadcast %898 : vector<1x128xf32> to vector<8x128xf32>
    %900 = arith.subf %896, %899 : vector<8x128xf32>
    %cst_360 = arith.constant 0.0316227749 : f32
    %901 = vector.broadcast %cst_360 : f32 to vector<8x128xf32>
    %902 = arith.mulf %901, %890 : vector<8x128xf32>
    %903 = arith.addf %900, %902 : vector<8x128xf32>
    %c45_i32 = arith.constant 45 : i32
    %cst_361 = arith.constant 0.000000e+00 : f32
    %904 = vector.broadcast %cst_361 : f32 to vector<8x128xf32>
    %905 = arith.maximumf %903, %904 : vector<8x128xf32>
    %cst_362 = arith.constant dense<0.000000e+00> : vector<128xf32>
    %906 = vector.multi_reduction <add>, %905, %cst_362 [0] : vector<8x128xf32> to vector<128xf32>
    %907 = vector.shape_cast %906 : vector<128xf32> to vector<1x128xf32>
    %908 = arith.index_cast %c45_i32 : i32 to index
    %c0_363 = arith.constant 0 : index
    %c0_364 = arith.constant 0 : index
    %909 = vector.load %arg2[%908, %c0_363, %c0_364] : memref<50x8x128xf32, #tpu.memory_space<vmem>>, vector<1x8x128xf32>
    %910 = vector.shape_cast %909 : vector<1x8x128xf32> to vector<8x128xf32>
    %cst_365 = arith.constant 9.990000e-01 : f32
    %911 = vector.broadcast %cst_365 : f32 to vector<8x128xf32>
    %912 = arith.mulf %903, %911 : vector<8x128xf32>
    %913 = arith.addf %912, %2 : vector<8x128xf32>
    %cst_366 = arith.constant 1.000000e-03 : f32
    %914 = vector.broadcast %cst_366 : f32 to vector<8x128xf32>
    %915 = arith.mulf %914, %905 : vector<8x128xf32>
    %916 = arith.addf %913, %915 : vector<8x128xf32>
    %cst_367 = arith.constant 1.000000e-03 : f32
    %917 = vector.broadcast %cst_367 : f32 to vector<1x128xf32>
    %918 = arith.mulf %917, %907 : vector<1x128xf32>
    %919 = vector.broadcast %918 : vector<1x128xf32> to vector<8x128xf32>
    %920 = arith.subf %916, %919 : vector<8x128xf32>
    %cst_368 = arith.constant 0.0316227749 : f32
    %921 = vector.broadcast %cst_368 : f32 to vector<8x128xf32>
    %922 = arith.mulf %921, %910 : vector<8x128xf32>
    %923 = arith.addf %920, %922 : vector<8x128xf32>
    %c46_i32 = arith.constant 46 : i32
    %cst_369 = arith.constant 0.000000e+00 : f32
    %924 = vector.broadcast %cst_369 : f32 to vector<8x128xf32>
    %925 = arith.maximumf %923, %924 : vector<8x128xf32>
    %cst_370 = arith.constant dense<0.000000e+00> : vector<128xf32>
    %926 = vector.multi_reduction <add>, %925, %cst_370 [0] : vector<8x128xf32> to vector<128xf32>
    %927 = vector.shape_cast %926 : vector<128xf32> to vector<1x128xf32>
    %928 = arith.index_cast %c46_i32 : i32 to index
    %c0_371 = arith.constant 0 : index
    %c0_372 = arith.constant 0 : index
    %929 = vector.load %arg2[%928, %c0_371, %c0_372] : memref<50x8x128xf32, #tpu.memory_space<vmem>>, vector<1x8x128xf32>
    %930 = vector.shape_cast %929 : vector<1x8x128xf32> to vector<8x128xf32>
    %cst_373 = arith.constant 9.990000e-01 : f32
    %931 = vector.broadcast %cst_373 : f32 to vector<8x128xf32>
    %932 = arith.mulf %923, %931 : vector<8x128xf32>
    %933 = arith.addf %932, %2 : vector<8x128xf32>
    %cst_374 = arith.constant 1.000000e-03 : f32
    %934 = vector.broadcast %cst_374 : f32 to vector<8x128xf32>
    %935 = arith.mulf %934, %925 : vector<8x128xf32>
    %936 = arith.addf %933, %935 : vector<8x128xf32>
    %cst_375 = arith.constant 1.000000e-03 : f32
    %937 = vector.broadcast %cst_375 : f32 to vector<1x128xf32>
    %938 = arith.mulf %937, %927 : vector<1x128xf32>
    %939 = vector.broadcast %938 : vector<1x128xf32> to vector<8x128xf32>
    %940 = arith.subf %936, %939 : vector<8x128xf32>
    %cst_376 = arith.constant 0.0316227749 : f32
    %941 = vector.broadcast %cst_376 : f32 to vector<8x128xf32>
    %942 = arith.mulf %941, %930 : vector<8x128xf32>
    %943 = arith.addf %940, %942 : vector<8x128xf32>
    %c47_i32 = arith.constant 47 : i32
    %cst_377 = arith.constant 0.000000e+00 : f32
    %944 = vector.broadcast %cst_377 : f32 to vector<8x128xf32>
    %945 = arith.maximumf %943, %944 : vector<8x128xf32>
    %cst_378 = arith.constant dense<0.000000e+00> : vector<128xf32>
    %946 = vector.multi_reduction <add>, %945, %cst_378 [0] : vector<8x128xf32> to vector<128xf32>
    %947 = vector.shape_cast %946 : vector<128xf32> to vector<1x128xf32>
    %948 = arith.index_cast %c47_i32 : i32 to index
    %c0_379 = arith.constant 0 : index
    %c0_380 = arith.constant 0 : index
    %949 = vector.load %arg2[%948, %c0_379, %c0_380] : memref<50x8x128xf32, #tpu.memory_space<vmem>>, vector<1x8x128xf32>
    %950 = vector.shape_cast %949 : vector<1x8x128xf32> to vector<8x128xf32>
    %cst_381 = arith.constant 9.990000e-01 : f32
    %951 = vector.broadcast %cst_381 : f32 to vector<8x128xf32>
    %952 = arith.mulf %943, %951 : vector<8x128xf32>
    %953 = arith.addf %952, %2 : vector<8x128xf32>
    %cst_382 = arith.constant 1.000000e-03 : f32
    %954 = vector.broadcast %cst_382 : f32 to vector<8x128xf32>
    %955 = arith.mulf %954, %945 : vector<8x128xf32>
    %956 = arith.addf %953, %955 : vector<8x128xf32>
    %cst_383 = arith.constant 1.000000e-03 : f32
    %957 = vector.broadcast %cst_383 : f32 to vector<1x128xf32>
    %958 = arith.mulf %957, %947 : vector<1x128xf32>
    %959 = vector.broadcast %958 : vector<1x128xf32> to vector<8x128xf32>
    %960 = arith.subf %956, %959 : vector<8x128xf32>
    %cst_384 = arith.constant 0.0316227749 : f32
    %961 = vector.broadcast %cst_384 : f32 to vector<8x128xf32>
    %962 = arith.mulf %961, %950 : vector<8x128xf32>
    %963 = arith.addf %960, %962 : vector<8x128xf32>
    %c48_i32 = arith.constant 48 : i32
    %cst_385 = arith.constant 0.000000e+00 : f32
    %964 = vector.broadcast %cst_385 : f32 to vector<8x128xf32>
    %965 = arith.maximumf %963, %964 : vector<8x128xf32>
    %cst_386 = arith.constant dense<0.000000e+00> : vector<128xf32>
    %966 = vector.multi_reduction <add>, %965, %cst_386 [0] : vector<8x128xf32> to vector<128xf32>
    %967 = vector.shape_cast %966 : vector<128xf32> to vector<1x128xf32>
    %968 = arith.index_cast %c48_i32 : i32 to index
    %c0_387 = arith.constant 0 : index
    %c0_388 = arith.constant 0 : index
    %969 = vector.load %arg2[%968, %c0_387, %c0_388] : memref<50x8x128xf32, #tpu.memory_space<vmem>>, vector<1x8x128xf32>
    %970 = vector.shape_cast %969 : vector<1x8x128xf32> to vector<8x128xf32>
    %cst_389 = arith.constant 9.990000e-01 : f32
    %971 = vector.broadcast %cst_389 : f32 to vector<8x128xf32>
    %972 = arith.mulf %963, %971 : vector<8x128xf32>
    %973 = arith.addf %972, %2 : vector<8x128xf32>
    %cst_390 = arith.constant 1.000000e-03 : f32
    %974 = vector.broadcast %cst_390 : f32 to vector<8x128xf32>
    %975 = arith.mulf %974, %965 : vector<8x128xf32>
    %976 = arith.addf %973, %975 : vector<8x128xf32>
    %cst_391 = arith.constant 1.000000e-03 : f32
    %977 = vector.broadcast %cst_391 : f32 to vector<1x128xf32>
    %978 = arith.mulf %977, %967 : vector<1x128xf32>
    %979 = vector.broadcast %978 : vector<1x128xf32> to vector<8x128xf32>
    %980 = arith.subf %976, %979 : vector<8x128xf32>
    %cst_392 = arith.constant 0.0316227749 : f32
    %981 = vector.broadcast %cst_392 : f32 to vector<8x128xf32>
    %982 = arith.mulf %981, %970 : vector<8x128xf32>
    %983 = arith.addf %980, %982 : vector<8x128xf32>
    %c49_i32 = arith.constant 49 : i32
    %cst_393 = arith.constant 0.000000e+00 : f32
    %984 = vector.broadcast %cst_393 : f32 to vector<8x128xf32>
    %985 = arith.maximumf %983, %984 : vector<8x128xf32>
    %cst_394 = arith.constant dense<0.000000e+00> : vector<128xf32>
    %986 = vector.multi_reduction <add>, %985, %cst_394 [0] : vector<8x128xf32> to vector<128xf32>
    %987 = vector.shape_cast %986 : vector<128xf32> to vector<1x128xf32>
    %988 = arith.index_cast %c49_i32 : i32 to index
    %c0_395 = arith.constant 0 : index
    %c0_396 = arith.constant 0 : index
    %989 = vector.load %arg2[%988, %c0_395, %c0_396] : memref<50x8x128xf32, #tpu.memory_space<vmem>>, vector<1x8x128xf32>
    %990 = vector.shape_cast %989 : vector<1x8x128xf32> to vector<8x128xf32>
    %cst_397 = arith.constant 9.990000e-01 : f32
    %991 = vector.broadcast %cst_397 : f32 to vector<8x128xf32>
    %992 = arith.mulf %983, %991 : vector<8x128xf32>
    %993 = arith.addf %992, %2 : vector<8x128xf32>
    %cst_398 = arith.constant 1.000000e-03 : f32
    %994 = vector.broadcast %cst_398 : f32 to vector<8x128xf32>
    %995 = arith.mulf %994, %985 : vector<8x128xf32>
    %996 = arith.addf %993, %995 : vector<8x128xf32>
    %cst_399 = arith.constant 1.000000e-03 : f32
    %997 = vector.broadcast %cst_399 : f32 to vector<1x128xf32>
    %998 = arith.mulf %997, %987 : vector<1x128xf32>
    %999 = vector.broadcast %998 : vector<1x128xf32> to vector<8x128xf32>
    %1000 = arith.subf %996, %999 : vector<8x128xf32>
    %cst_400 = arith.constant 0.0316227749 : f32
    %1001 = vector.broadcast %cst_400 : f32 to vector<8x128xf32>
    %1002 = arith.mulf %1001, %990 : vector<8x128xf32>
    %1003 = arith.addf %1000, %1002 : vector<8x128xf32>
    %c50_i32 = arith.constant 50 : i32
    %cst_401 = arith.constant 0.000000e+00 : f32
    %1004 = vector.broadcast %cst_401 : f32 to vector<8x128xf32>
    %1005 = arith.maximumf %1003, %1004 : vector<8x128xf32>
    %cst_402 = arith.constant 5.000000e-01 : f32
    %1006 = vector.broadcast %cst_402 : f32 to vector<1x128xf32>
    %c0_403 = arith.constant 0 : index
    %c0_404 = arith.constant 0 : index
    %1007 = vector.load %arg3[%c0_403, %c0_404] : memref<1x128xf32, #tpu.memory_space<vmem>>, vector<1x128xf32>
    tpu.vector_store %arg3[%c0_403, %c0_404], %1006 {strides = array<i32>} : memref<1x128xf32, #tpu.memory_space<vmem>>, vector<1x128xf32>,
    %cst_405 = arith.constant dense<0xFF800000> : vector<128xf32>
    %1008 = vector.multi_reduction <maximumf>, %1005, %cst_405 [0] : vector<8x128xf32> to vector<128xf32>
    %1009 = vector.shape_cast %1008 : vector<128xf32> to vector<1x128xf32>
    %1010 = tpu.iota {dimensions = array<i32: 0>} : vector<8x128xi32>
    %1011 = vector.broadcast %1009 : vector<1x128xf32> to vector<8x128xf32>
    %1012 = arith.cmpf oeq, %1005, %1011 : vector<8x128xf32>
    %c2147483647_i32 = arith.constant 2147483647 : i32
    %1013 = vector.broadcast %c2147483647_i32 : i32 to vector<8x128xi32>
    %1014 = arith.select %1012, %1010, %1013 : vector<8x128xi1>, vector<8x128xi32>
    %cst_406 = arith.constant dense<2147483647> : vector<128xi32>
    %1015 = vector.multi_reduction <minsi>, %1014, %cst_406 [0] : vector<8x128xi32> to vector<128xi32>
    %1016 = vector.shape_cast %1015 : vector<128xi32> to vector<1x128xi32>
    %c0_407 = arith.constant 0 : index
    %c0_408 = arith.constant 0 : index
    %1017 = vector.load %arg4[%c0_407, %c0_408] : memref<1x128xi32, #tpu.memory_space<vmem>>, vector<1x128xi32>
    tpu.vector_store %arg4[%c0_407, %c0_408], %1016 {strides = array<i32>} : memref<1x128xi32, #tpu.memory_space<vmem>>, vector<1x128xi32>,
    return
  }
  func.func @transform_0(%arg0: i32) -> (i32, i32) {
    %c0_i32 = arith.constant 0 : i32
    %c0_i32_0 = arith.constant 0 : i32
    %c0_i32_1 = arith.constant 0 : i32
    return %c0_i32, %c0_i32_0 : i32, i32
  }
  func.func @transform_1(%arg0: i32) -> (i32, i32, i32) {
    %c0_i32 = arith.constant 0 : i32
    %c0_i32_0 = arith.constant 0 : i32
    %c0_i32_1 = arith.constant 0 : i32
    return %c0_i32, %c0_i32_0, %arg0 : i32, i32, i32
  }
  func.func @transform_2(%arg0: i32) -> (i32, i32) {
    %c0_i32 = arith.constant 0 : i32
    %c0_i32_0 = arith.constant 0 : i32
    return %c0_i32, %arg0 : i32, i32
  }
  func.func @transform_3(%arg0: i32) -> (i32, i32) {
    %c0_i32 = arith.constant 0 : i32
    %c0_i32_0 = arith.constant 0 : i32
    return %c0_i32, %arg0 : i32, i32
  }
}

</mosaic_0001>

<llo_original>
// kernel: tpu_custom_call.1
$region0: #{tpu_custom_call.1}
  #allocation0 [shape = 'u32[]', space=smem, size = 0x4, offset = 0x4, fixed_abs, tag = 'smem constant byte address 0x4 - core index']
  #allocation1 [shape = 'u32[144,128]{1,0:T(1,128)}', space=vmem, size = 0x12000, scoped, tag = 'internal scratch']
  %s0 = inlined_call_operand.vmem [shape: f32[8,1], index: 0, kind: input, shape index: {}]
  %s1 = inlined_call_operand.hbm [shape: f32[50,8,128], index: 1, kind: input, shape index: {}]
  %s2 = inlined_call_operand.hbm [shape: f32[1,128], index: 2, kind: output, shape index: {0}]
  %s3 = inlined_call_operand.hbm [shape: s32[1,128], index: 3, kind: output, shape index: {1}]
  %4 = xla_tuple %s2, %s3
  %s5 = sld [smem:[#allocation0]]
  $region30: #{tpu_custom_call.1} parent=0
    _
  %s7 = ssub.s32 1, %s5
  %s8 = scalar_select 0, %s7, %s5
  $region1: #{tpu_custom_call.1} parent=0
    #allocation2 [shape = 'u8[204800]{0}', space=vmem, size = 0x32000, scoped, tag = 'input window, operand 1, single buffered']
    #allocation3 [shape = 's32[1]{0}', space=sflag, size = 0x4, scoped, tag = 'scoped memory for tpu_custom_call.1']
    #allocation4 [shape = 's32[1]{0}', space=sflag, size = 0x4, scoped, tag = 'scoped memory for tpu_custom_call.1']
    #allocation5 [shape = 'u8[512]{0}', space=vmem, size = 0x400, scoped, tag = 'output window, operand 0, single buffered']
    #allocation6 [shape = 'u8[512]{0}', space=vmem, size = 0x400, scoped, tag = 'output window, operand 1, single buffered']
    #allocation7 [shape = 's32[1]{0}', space=sflag, size = 0x4, scoped, tag = 'scoped memory for tpu_custom_call.1']
    %9 = vsyncpa [#allocation3], 0
    %10 = vsyncpa [#allocation4], 0
    %11 = vsyncpa [#allocation7], 0
    // Predicated region
    $region2: #{tpu_custom_call.1} parent=1 // pred_check
      _
    $region3: #{tpu_custom_call.1} parent=1 // pred_check_branch
      %13 = sbr.rel (0) target = $region5
    $region4: #{tpu_custom_call.1} parent=1 // pred_region
      _
    $region5: #{tpu_custom_call.1} parent=1 // pred_fallthru
      _
    // Predicated region
    $region6: #{tpu_custom_call.1} parent=1 // pred_check
      _
    $region7: #{tpu_custom_call.1} parent=1 // pred_check_branch
      %15 = sbr.rel (0) target = $region9
    $region8: #{tpu_custom_call.1} parent=1 // pred_region
      %s17 = ssub.s32 6400, 6400
      %18 = vsyncadd [#allocation3], %s17
      %s19 = sshll.u32 [#allocation2], 4
      %s20 = int_to_ptr.vmem [resolvable:$true] %s19
      %25 = dma.hbm_to_vmem [thread:$0]  %s1, 6400, %s20, [#allocation3], 128, 128, 8
    $region9: #{tpu_custom_call.1} parent=1 // pred_fallthru
      _
    // Predicated region
    $region10: #{tpu_custom_call.1} parent=1 // pred_check
      _
    $region11: #{tpu_custom_call.1} parent=1 // pred_check_branch
      %27 = sbr.rel (0) target = $region13
    $region12: #{tpu_custom_call.1} parent=1 // pred_region
      %28 = dma.done [#allocation3], 6400
    $region13: #{tpu_custom_call.1} parent=1 // pred_fallthru
      _
    %v29 = vld [vmem:[%s0] sm:$0xff]
    %31 = vset.pattern.permute.xlu0 0
    %32 = vperm.xlu0 %31, %v29
    %v33 = vpop.permute.xlu0 %32
    %v35 = vld [vmem:[#allocation2] sm:$0xff]
    %v36 = vadd.f32 %v33, 0.0
    %v37 = vadd.f32 %v36, 0.0
    %v38 = vmul.f32 0.0, 0.001
    %v39 = vsub.f32 %v37, %v38
    %v40 = vmul.f32 %v35, 0.031622775
    %v41 = vadd.f32 %v39, %v40
    %v42 = vmax.f32 %v41, 0.0
    %v43 = vrot.slane %v42, 4
    %v44 = vadd.f32 %v42, %v43
    %v45 = vrot.slane %v44, 2
    %v46 = vadd.f32 %v44, %v45
    %v47 = vrot.slane %v46, 1
    %v48 = vadd.f32 %v46, %v47
    %s49 = scalar_lea.vmem [#allocation2], 8
    %v50 = vld [vmem:[%s49] sm:$0xff]
    %v51 = vmul.f32 %v41, 0.999
    %v52 = vadd.f32 %v51, %v33
    %v53 = vmul.f32 %v42, 0.001
    %v54 = vadd.f32 %v52, %v53
    %v55 = vmul.f32 %v48, 0.001
    %v56 = vsub.f32 %v54, %v55
    %v57 = vmul.f32 %v50, 0.031622775
    %v58 = vadd.f32 %v56, %v57
    %v59 = vmax.f32 %v58, 0.0
    %v60 = vrot.slane %v59, 4
    %v61 = vadd.f32 %v59, %v60
    %v62 = vrot.slane %v61, 2
    %v63 = vadd.f32 %v61, %v62
    %v64 = vrot.slane %v63, 1
    %v65 = vadd.f32 %v63, %v64
    %s66 = scalar_lea.vmem [#allocation2], 16
    %v67 = vld [vmem:[%s66] sm:$0xff]
    %v68 = vmul.f32 %v58, 0.999
    %v69 = vadd.f32 %v68, %v33
    %v70 = vmul.f32 %v59, 0.001
    %v71 = vadd.f32 %v69, %v70
    %v72 = vmul.f32 %v65, 0.001
    %v73 = vsub.f32 %v71, %v72
    %v74 = vmul.f32 %v67, 0.031622775
    %v75 = vadd.f32 %v73, %v74
    %v76 = vmax.f32 %v75, 0.0
    %v77 = vrot.slane %v76, 4
    %v78 = vadd.f32 %v76, %v77
    %v79 = vrot.slane %v78, 2
    %v80 = vadd.f32 %v78, %v79
    %v81 = vrot.slane %v80, 1
    %v82 = vadd.f32 %v80, %v81
    %s83 = scalar_lea.vmem [#allocation2], 24
    %v84 = vld [vmem:[%s83] sm:$0xff]
    %v85 = vmul.f32 %v75, 0.999
    %v86 = vadd.f32 %v85, %v33
    %v87 = vmul.f32 %v76, 0.001
    %v88 = vadd.f32 %v86, %v87
    %v89 = vmul.f32 %v82, 0.001
    %v90 = vsub.f32 %v88, %v89
    %v91 = vmul.f32 %v84, 0.031622775
    %v92 = vadd.f32 %v90, %v91
    %v93 = vmax.f32 %v92, 0.0
    %v94 = vrot.slane %v93, 4
    %v95 = vadd.f32 %v93, %v94
    %v96 = vrot.slane %v95, 2
    %v97 = vadd.f32 %v95, %v96
    %v98 = vrot.slane %v97, 1
    %v99 = vadd.f32 %v97, %v98
    %s100 = scalar_lea.vmem [#allocation2], 32
    %v101 = vld [vmem:[%s100] sm:$0xff]
    %v102 = vmul.f32 %v92, 0.999
    %v103 = vadd.f32 %v102, %v33
    %v104 = vmul.f32 %v93, 0.001
    %v105 = vadd.f32 %v103, %v104
    %v106 = vmul.f32 %v99, 0.001
    %v107 = vsub.f32 %v105, %v106
    %v108 = vmul.f32 %v101, 0.031622775
    %v109 = vadd.f32 %v107, %v108
    %v110 = vmax.f32 %v109, 0.0
    %v111 = vrot.slane %v110, 4
    %v112 = vadd.f32 %v110, %v111
    %v113 = vrot.slane %v112, 2
    %v114 = vadd.f32 %v112, %v113
    %v115 = vrot.slane %v114, 1
    %v116 = vadd.f32 %v114, %v115
    %s117 = scalar_lea.vmem [#allocation2], 40
    %v118 = vld [vmem:[%s117] sm:$0xff]
    %v119 = vmul.f32 %v109, 0.999
    %v120 = vadd.f32 %v119, %v33
    %v121 = vmul.f32 %v110, 0.001
    %v122 = vadd.f32 %v120, %v121
    %v123 = vmul.f32 %v116, 0.001
    %v124 = vsub.f32 %v122, %v123
    %v125 = vmul.f32 %v118, 0.031622775
    %v126 = vadd.f32 %v124, %v125
    %v127 = vmax.f32 %v126, 0.0
    %v128 = vrot.slane %v127, 4
    %v129 = vadd.f32 %v127, %v128
    %v130 = vrot.slane %v129, 2
    %v131 = vadd.f32 %v129, %v130
    %v132 = vrot.slane %v131, 1
    %v133 = vadd.f32 %v131, %v132
    %s134 = scalar_lea.vmem [#allocation2], 48
    %v135 = vld [vmem:[%s134] sm:$0xff]
    %v136 = vmul.f32 %v126, 0.999
    %v137 = vadd.f32 %v136, %v33
    %v138 = vmul.f32 %v127, 0.001
    %v139 = vadd.f32 %v137, %v138
    %v140 = vmul.f32 %v133, 0.001
    %v141 = vsub.f32 %v139, %v140
    %v142 = vmul.f32 %v135, 0.031622775
    %v143 = vadd.f32 %v141, %v142
    %v144 = vmax.f32 %v143, 0.0
    %v145 = vrot.slane %v144, 4
    %v146 = vadd.f32 %v144, %v145
    %v147 = vrot.slane %v146, 2
    %v148 = vadd.f32 %v146, %v147
    %v149 = vrot.slane %v148, 1
    %v150 = vadd.f32 %v148, %v149
    %s151 = scalar_lea.vmem [#allocation2], 56
    %v152 = vld [vmem:[%s151] sm:$0xff]
    %v153 = vmul.f32 %v143, 0.999
    %v154 = vadd.f32 %v153, %v33
    %v155 = vmul.f32 %v144, 0.001
    %v156 = vadd.f32 %v154, %v155
    %v157 = vmul.f32 %v150, 0.001
    %v158 = vsub.f32 %v156, %v157
    %v159 = vmul.f32 %v152, 0.031622775
    %v160 = vadd.f32 %v158, %v159
    %v161 = vmax.f32 %v160, 0.0
    %v162 = vrot.slane %v161, 4
    %v163 = vadd.f32 %v161, %v162
    %v164 = vrot.slane %v163, 2
    %v165 = vadd.f32 %v163, %v164
    %v166 = vrot.slane %v165, 1
    %v167 = vadd.f32 %v165, %v166
    %s168 = scalar_lea.vmem [#allocation2], 64
    %v169 = vld [vmem:[%s168] sm:$0xff]
    %v170 = vmul.f32 %v160, 0.999
    %v171 = vadd.f32 %v170, %v33
    %v172 = vmul.f32 %v161, 0.001
    %v173 = vadd.f32 %v171, %v172
    %v174 = vmul.f32 %v167, 0.001
    %v175 = vsub.f32 %v173, %v174
    %v176 = vmul.f32 %v169, 0.031622775
    %v177 = vadd.f32 %v175, %v176
    %v178 = vmax.f32 %v177, 0.0
    %v179 = vrot.slane %v178, 4
    %v180 = vadd.f32 %v178, %v179
    %v181 = vrot.slane %v180, 2
    %v182 = vadd.f32 %v180, %v181
    %v183 = vrot.slane %v182, 1
    %v184 = vadd.f32 %v182, %v183
    %s185 = scalar_lea.vmem [#allocation2], 72
    %v186 = vld [vmem:[%s185] sm:$0xff]
    %v187 = vmul.f32 %v177, 0.999
    %v188 = vadd.f32 %v187, %v33
    %v189 = vmul.f32 %v178, 0.001
    %v190 = vadd.f32 %v188, %v189
    %v191 = vmul.f32 %v184, 0.001
    %v192 = vsub.f32 %v190, %v191
    %v193 = vmul.f32 %v186, 0.031622775
    %v194 = vadd.f32 %v192, %v193
    %v195 = vmax.f32 %v194, 0.0
    %v196 = vrot.slane %v195, 4
    %v197 = vadd.f32 %v195, %v196
    %v198 = vrot.slane %v197, 2
    %v199 = vadd.f32 %v197, %v198
    %v200 = vrot.slane %v199, 1
    %v201 = vadd.f32 %v199, %v200
    %s202 = scalar_lea.vmem [#allocation2], 80
    %v203 = vld [vmem:[%s202] sm:$0xff]
    %v204 = vmul.f32 %v194, 0.999
    %v205 = vadd.f32 %v204, %v33
    %v206 = vmul.f32 %v195, 0.001
    %v207 = vadd.f32 %v205, %v206
    %v208 = vmul.f32 %v201, 0.001
    %v209 = vsub.f32 %v207, %v208
    %v210 = vmul.f32 %v203, 0.031622775
    %v211 = vadd.f32 %v209, %v210
    %v212 = vmax.f32 %v211, 0.0
    %v213 = vrot.slane %v212, 4
    %v214 = vadd.f32 %v212, %v213
    %v215 = vrot.slane %v214, 2
    %v216 = vadd.f32 %v214, %v215
    %v217 = vrot.slane %v216, 1
    %v218 = vadd.f32 %v216, %v217
    %s219 = scalar_lea.vmem [#allocation2], 88
    %v220 = vld [vmem:[%s219] sm:$0xff]
    %v221 = vmul.f32 %v211, 0.999
    %v222 = vadd.f32 %v221, %v33
    %v223 = vmul.f32 %v212, 0.001
    %v224 = vadd.f32 %v222, %v223
    %v225 = vmul.f32 %v218, 0.001
    %v226 = vsub.f32 %v224, %v225
    %v227 = vmul.f32 %v220, 0.031622775
    %v228 = vadd.f32 %v226, %v227
    %v229 = vmax.f32 %v228, 0.0
    %v230 = vrot.slane %v229, 4
    %v231 = vadd.f32 %v229, %v230
    %v232 = vrot.slane %v231, 2
    %v233 = vadd.f32 %v231, %v232
    %v234 = vrot.slane %v233, 1
    %v235 = vadd.f32 %v233, %v234
    %s236 = scalar_lea.vmem [#allocation2], 96
    %v237 = vld [vmem:[%s236] sm:$0xff]
    %v238 = vmul.f32 %v228, 0.999
    %v239 = vadd.f32 %v238, %v33
    %v240 = vmul.f32 %v229, 0.001
    %v241 = vadd.f32 %v239, %v240
    %v242 = vmul.f32 %v235, 0.001
    %v243 = vsub.f32 %v241, %v242
    %v244 = vmul.f32 %v237, 0.031622775
    %v245 = vadd.f32 %v243, %v244
    %v246 = vmax.f32 %v245, 0.0
    %v247 = vrot.slane %v246, 4
    %v248 = vadd.f32 %v246, %v247
    %v249 = vrot.slane %v248, 2
    %v250 = vadd.f32 %v248, %v249
    %v251 = vrot.slane %v250, 1
    %v252 = vadd.f32 %v250, %v251
    %s253 = scalar_lea.vmem [#allocation2], 104
    %v254 = vld [vmem:[%s253] sm:$0xff]
    %v255 = vmul.f32 %v245, 0.999
    %v256 = vadd.f32 %v255, %v33
    %v257 = vmul.f32 %v246, 0.001
    %v258 = vadd.f32 %v256, %v257
    %v259 = vmul.f32 %v252, 0.001
    %v260 = vsub.f32 %v258, %v259
    %v261 = vmul.f32 %v254, 0.031622775
    %v262 = vadd.f32 %v260, %v261
    %v263 = vmax.f32 %v262, 0.0
    %v264 = vrot.slane %v263, 4
    %v265 = vadd.f32 %v263, %v264
    %v266 = vrot.slane %v265, 2
    %v267 = vadd.f32 %v265, %v266
    %v268 = vrot.slane %v267, 1
    %v269 = vadd.f32 %v267, %v268
    %s270 = scalar_lea.vmem [#allocation2], 112
    %v271 = vld [vmem:[%s270] sm:$0xff]
    %v272 = vmul.f32 %v262, 0.999
    %v273 = vadd.f32 %v272, %v33
    %v274 = vmul.f32 %v263, 0.001
    %v275 = vadd.f32 %v273, %v274
    %v276 = vmul.f32 %v269, 0.001
    %v277 = vsub.f32 %v275, %v276
    %v278 = vmul.f32 %v271, 0.031622775
    %v279 = vadd.f32 %v277, %v278
    %v280 = vmax.f32 %v279, 0.0
    %v281 = vrot.slane %v280, 4
    %v282 = vadd.f32 %v280, %v281
    %v283 = vrot.slane %v282, 2
    %v284 = vadd.f32 %v282, %v283
    %v285 = vrot.slane %v284, 1
    %v286 = vadd.f32 %v284, %v285
    %s287 = scalar_lea.vmem [#allocation2], 120
    %v288 = vld [vmem:[%s287] sm:$0xff]
    %v289 = vmul.f32 %v279, 0.999
    %v290 = vadd.f32 %v289, %v33
    %v291 = vmul.f32 %v280, 0.001
    %v292 = vadd.f32 %v290, %v291
    %v293 = vmul.f32 %v286, 0.001
    %v294 = vsub.f32 %v292, %v293
    %v295 = vmul.f32 %v288, 0.031622775
    %v296 = vadd.f32 %v294, %v295
    %v297 = vmax.f32 %v296, 0.0
    %v298 = vrot.slane %v297, 4
    %v299 = vadd.f32 %v297, %v298
    %v300 = vrot.slane %v299, 2
    %v301 = vadd.f32 %v299, %v300
    %v302 = vrot.slane %v301, 1
    %v303 = vadd.f32 %v301, %v302
    %s304 = scalar_lea.vmem [#allocation2], 128
    %v305 = vld [vmem:[%s304] sm:$0xff]
    %v306 = vmul.f32 %v296, 0.999
    %v307 = vadd.f32 %v306, %v33
    %v308 = vmul.f32 %v297, 0.001
    %v309 = vadd.f32 %v307, %v308
    %v310 = vmul.f32 %v303, 0.001
    %v311 = vsub.f32 %v309, %v310
    %v312 = vmul.f32 %v305, 0.031622775
    %v313 = vadd.f32 %v311, %v312
    %v314 = vmax.f32 %v313, 0.0
    %v315 = vrot.slane %v314, 4
    %v316 = vadd.f32 %v314, %v315
    %v317 = vrot.slane %v316, 2
    %v318 = vadd.f32 %v316, %v317
    %v319 = vrot.slane %v318, 1
    %v320 = vadd.f32 %v318, %v319
    %s321 = scalar_lea.vmem [#allocation2], 136
    %v322 = vld [vmem:[%s321] sm:$0xff]
    %v323 = vmul.f32 %v313, 0.999
    %v324 = vadd.f32 %v323, %v33
    %v325 = vmul.f32 %v314, 0.001
    %v326 = vadd.f32 %v324, %v325
    %v327 = vmul.f32 %v320, 0.001
    %v328 = vsub.f32 %v326, %v327
    %v329 = vmul.f32 %v322, 0.031622775
    %v330 = vadd.f32 %v328, %v329
    %v331 = vmax.f32 %v330, 0.0
    %v332 = vrot.slane %v331, 4
    %v333 = vadd.f32 %v331, %v332
    %v334 = vrot.slane %v333, 2
    %v335 = vadd.f32 %v333, %v334
    %v336 = vrot.slane %v335, 1
    %v337 = vadd.f32 %v335, %v336
    %s338 = scalar_lea.vmem [#allocation2], 144
    %v339 = vld [vmem:[%s338] sm:$0xff]
    %v340 = vmul.f32 %v330, 0.999
    %v341 = vadd.f32 %v340, %v33
    %v342 = vmul.f32 %v331, 0.001
    %v343 = vadd.f32 %v341, %v342
    %v344 = vmul.f32 %v337, 0.001
    %v345 = vsub.f32 %v343, %v344
    %v346 = vmul.f32 %v339, 0.031622775
    %v347 = vadd.f32 %v345, %v346
    %v348 = vmax.f32 %v347, 0.0
    %v349 = vrot.slane %v348, 4
    %v350 = vadd.f32 %v348, %v349
    %v351 = vrot.slane %v350, 2
    %v352 = vadd.f32 %v350, %v351
    %v353 = vrot.slane %v352, 1
    %v354 = vadd.f32 %v352, %v353
    %s355 = scalar_lea.vmem [#allocation2], 152
    %v356 = vld [vmem:[%s355] sm:$0xff]
    %v357 = vmul.f32 %v347, 0.999
    %v358 = vadd.f32 %v357, %v33
    %v359 = vmul.f32 %v348, 0.001
    %v360 = vadd.f32 %v358, %v359
    %v361 = vmul.f32 %v354, 0.001
    %v362 = vsub.f32 %v360, %v361
    %v363 = vmul.f32 %v356, 0.031622775
    %v364 = vadd.f32 %v362, %v363
    %v365 = vmax.f32 %v364, 0.0
    %v366 = vrot.slane %v365, 4
    %v367 = vadd.f32 %v365, %v366
    %v368 = vrot.slane %v367, 2
    %v369 = vadd.f32 %v367, %v368
    %v370 = vrot.slane %v369, 1
    %v371 = vadd.f32 %v369, %v370
    %s372 = scalar_lea.vmem [#allocation2], 160
    %v373 = vld [vmem:[%s372] sm:$0xff]
    %v374 = vmul.f32 %v364, 0.999
    %v375 = vadd.f32 %v374, %v33
    %v376 = vmul.f32 %v365, 0.001
    %v377 = vadd.f32 %v375, %v376
    %v378 = vmul.f32 %v371, 0.001
    %v379 = vsub.f32 %v377, %v378
    %v380 = vmul.f32 %v373, 0.031622775
    %v381 = vadd.f32 %v379, %v380
    %v382 = vmax.f32 %v381, 0.0
    %v383 = vrot.slane %v382, 4
    %v384 = vadd.f32 %v382, %v383
    %v385 = vrot.slane %v384, 2
    %v386 = vadd.f32 %v384, %v385
    %v387 = vrot.slane %v386, 1
    %v388 = vadd.f32 %v386, %v387
    %s389 = scalar_lea.vmem [#allocation2], 168
    %v390 = vld [vmem:[%s389] sm:$0xff]
    %v391 = vmul.f32 %v381, 0.999
    %v392 = vadd.f32 %v391, %v33
    %v393 = vmul.f32 %v382, 0.001
    %v394 = vadd.f32 %v392, %v393
    %v395 = vmul.f32 %v388, 0.001
    %v396 = vsub.f32 %v394, %v395
    %v397 = vmul.f32 %v390, 0.031622775
    %v398 = vadd.f32 %v396, %v397
    %v399 = vmax.f32 %v398, 0.0
    %v400 = vrot.slane %v399, 4
    %v401 = vadd.f32 %v399, %v400
    %v402 = vrot.slane %v401, 2
    %v403 = vadd.f32 %v401, %v402
    %v404 = vrot.slane %v403, 1
    %v405 = vadd.f32 %v403, %v404
    %s406 = scalar_lea.vmem [#allocation2], 176
    %v407 = vld [vmem:[%s406] sm:$0xff]
    %v408 = vmul.f32 %v398, 0.999
    %v409 = vadd.f32 %v408, %v33
    %v410 = vmul.f32 %v399, 0.001
    %v411 = vadd.f32 %v409, %v410
    %v412 = vmul.f32 %v405, 0.001
    %v413 = vsub.f32 %v411, %v412
    %v414 = vmul.f32 %v407, 0.031622775
    %v415 = vadd.f32 %v413, %v414
    %v416 = vmax.f32 %v415, 0.0
    %v417 = vrot.slane %v416, 4
    %v418 = vadd.f32 %v416, %v417
    %v419 = vrot.slane %v418, 2
    %v420 = vadd.f32 %v418, %v419
    %v421 = vrot.slane %v420, 1
    %v422 = vadd.f32 %v420, %v421
    %s423 = scalar_lea.vmem [#allocation2], 184
    %v424 = vld [vmem:[%s423] sm:$0xff]
    %v425 = vmul.f32 %v415, 0.999
    %v426 = vadd.f32 %v425, %v33
    %v427 = vmul.f32 %v416, 0.001
    %v428 = vadd.f32 %v426, %v427
    %v429 = vmul.f32 %v422, 0.001
    %v430 = vsub.f32 %v428, %v429
    %v431 = vmul.f32 %v424, 0.031622775
    %v432 = vadd.f32 %v430, %v431
    %v433 = vmax.f32 %v432, 0.0
    %v434 = vrot.slane %v433, 4
    %v435 = vadd.f32 %v433, %v434
    %v436 = vrot.slane %v435, 2
    %v437 = vadd.f32 %v435, %v436
    %v438 = vrot.slane %v437, 1
    %v439 = vadd.f32 %v437, %v438
    %s440 = scalar_lea.vmem [#allocation2], 192
    %v441 = vld [vmem:[%s440] sm:$0xff]
    %v442 = vmul.f32 %v432, 0.999
    %v443 = vadd.f32 %v442, %v33
    %v444 = vmul.f32 %v433, 0.001
    %v445 = vadd.f32 %v443, %v444
    %v446 = vmul.f32 %v439, 0.001
    %v447 = vsub.f32 %v445, %v446
    %v448 = vmul.f32 %v441, 0.031622775
    %v449 = vadd.f32 %v447, %v448
    %v450 = vmax.f32 %v449, 0.0
    %v451 = vrot.slane %v450, 4
    %v452 = vadd.f32 %v450, %v451
    %v453 = vrot.slane %v452, 2
    %v454 = vadd.f32 %v452, %v453
    %v455 = vrot.slane %v454, 1
    %v456 = vadd.f32 %v454, %v455
    %s457 = scalar_lea.vmem [#allocation2], 200
    %v458 = vld [vmem:[%s457] sm:$0xff]
    %v459 = vmul.f32 %v449, 0.999
    %v460 = vadd.f32 %v459, %v33
    %v461 = vmul.f32 %v450, 0.001
    %v462 = vadd.f32 %v460, %v461
    %v463 = vmul.f32 %v456, 0.001
    %v464 = vsub.f32 %v462, %v463
    %v465 = vmul.f32 %v458, 0.031622775
    %v466 = vadd.f32 %v464, %v465
    %v467 = vmax.f32 %v466, 0.0
    %v468 = vrot.slane %v467, 4
    %v469 = vadd.f32 %v467, %v468
    %v470 = vrot.slane %v469, 2
    %v471 = vadd.f32 %v469, %v470
    %v472 = vrot.slane %v471, 1
    %v473 = vadd.f32 %v471, %v472
    %s474 = scalar_lea.vmem [#allocation2], 208
    %v475 = vld [vmem:[%s474] sm:$0xff]
    %v476 = vmul.f32 %v466, 0.999
    %v477 = vadd.f32 %v476, %v33
    %v478 = vmul.f32 %v467, 0.001
    %v479 = vadd.f32 %v477, %v478
    %v480 = vmul.f32 %v473, 0.001
    %v481 = vsub.f32 %v479, %v480
    %v482 = vmul.f32 %v475, 0.031622775
    %v483 = vadd.f32 %v481, %v482
    %v484 = vmax.f32 %v483, 0.0
    %v485 = vrot.slane %v484, 4
    %v486 = vadd.f32 %v484, %v485
    %v487 = vrot.slane %v486, 2
    %v488 = vadd.f32 %v486, %v487
    %v489 = vrot.slane %v488, 1
    %v490 = vadd.f32 %v488, %v489
    %s491 = scalar_lea.vmem [#allocation2], 216
    %v492 = vld [vmem:[%s491] sm:$0xff]
    %v493 = vmul.f32 %v483, 0.999
    %v494 = vadd.f32 %v493, %v33
    %v495 = vmul.f32 %v484, 0.001
    %v496 = vadd.f32 %v494, %v495
    %v497 = vmul.f32 %v490, 0.001
    %v498 = vsub.f32 %v496, %v497
    %v499 = vmul.f32 %v492, 0.031622775
    %v500 = vadd.f32 %v498, %v499
    %v501 = vmax.f32 %v500, 0.0
    %v502 = vrot.slane %v501, 4
    %v503 = vadd.f32 %v501, %v502
    %v504 = vrot.slane %v503, 2
    %v505 = vadd.f32 %v503, %v504
    %v506 = vrot.slane %v505, 1
    %v507 = vadd.f32 %v505, %v506
    %s508 = scalar_lea.vmem [#allocation2], 224
    %v509 = vld [vmem:[%s508] sm:$0xff]
    %v510 = vmul.f32 %v500, 0.999
    %v511 = vadd.f32 %v510, %v33
    %v512 = vmul.f32 %v501, 0.001
    %v513 = vadd.f32 %v511, %v512
    %v514 = vmul.f32 %v507, 0.001
    %v515 = vsub.f32 %v513, %v514
    %v516 = vmul.f32 %v509, 0.031622775
    %v517 = vadd.f32 %v515, %v516
    %v518 = vmax.f32 %v517, 0.0
    %v519 = vrot.slane %v518, 4
    %v520 = vadd.f32 %v518, %v519
    %v521 = vrot.slane %v520, 2
    %v522 = vadd.f32 %v520, %v521
    %v523 = vrot.slane %v522, 1
    %v524 = vadd.f32 %v522, %v523
    %s525 = scalar_lea.vmem [#allocation2], 232
    %v526 = vld [vmem:[%s525] sm:$0xff]
    %v527 = vmul.f32 %v517, 0.999
    %v528 = vadd.f32 %v527, %v33
    %v529 = vmul.f32 %v518, 0.001
    %v530 = vadd.f32 %v528, %v529
    %v531 = vmul.f32 %v524, 0.001
    %v532 = vsub.f32 %v530, %v531
    %v533 = vmul.f32 %v526, 0.031622775
    %v534 = vadd.f32 %v532, %v533
    %v535 = vmax.f32 %v534, 0.0
    %v536 = vrot.slane %v535, 4
    %v537 = vadd.f32 %v535, %v536
    %v538 = vrot.slane %v537, 2
    %v539 = vadd.f32 %v537, %v538
    %v540 = vrot.slane %v539, 1
    %v541 = vadd.f32 %v539, %v540
    %s542 = scalar_lea.vmem [#allocation2], 240
    %v543 = vld [vmem:[%s542] sm:$0xff]
    %v544 = vmul.f32 %v534, 0.999
    %v545 = vadd.f32 %v544, %v33
    %v546 = vmul.f32 %v535, 0.001
    %v547 = vadd.f32 %v545, %v546
    %v548 = vmul.f32 %v541, 0.001
    %v549 = vsub.f32 %v547, %v548
    %v550 = vmul.f32 %v543, 0.031622775
    %v551 = vadd.f32 %v549, %v550
    %v552 = vmax.f32 %v551, 0.0
    %v553 = vrot.slane %v552, 4
    %v554 = vadd.f32 %v552, %v553
    %v555 = vrot.slane %v554, 2
    %v556 = vadd.f32 %v554, %v555
    %v557 = vrot.slane %v556, 1
    %v558 = vadd.f32 %v556, %v557
    %s559 = scalar_lea.vmem [#allocation2], 248
    %v560 = vld [vmem:[%s559] sm:$0xff]
    %v561 = vmul.f32 %v551, 0.999
    %v562 = vadd.f32 %v561, %v33
    %v563 = vmul.f32 %v552, 0.001
    %v564 = vadd.f32 %v562, %v563
    %v565 = vmul.f32 %v558, 0.001
    %v566 = vsub.f32 %v564, %v565
    %v567 = vmul.f32 %v560, 0.031622775
    %v568 = vadd.f32 %v566, %v567
    %v569 = vmax.f32 %v568, 0.0
    %v570 = vrot.slane %v569, 4
    %v571 = vadd.f32 %v569, %v570
    %v572 = vrot.slane %v571, 2
    %v573 = vadd.f32 %v571, %v572
    %v574 = vrot.slane %v573, 1
    %v575 = vadd.f32 %v573, %v574
    %s576 = scalar_lea.vmem [#allocation2], 256
    %v577 = vld [vmem:[%s576] sm:$0xff]
    %v578 = vmul.f32 %v568, 0.999
    %v579 = vadd.f32 %v578, %v33
    %v580 = vmul.f32 %v569, 0.001
    %v581 = vadd.f32 %v579, %v580
    %v582 = vmul.f32 %v575, 0.001
    %v583 = vsub.f32 %v581, %v582
    %v584 = vmul.f32 %v577, 0.031622775
    %v585 = vadd.f32 %v583, %v584
    %v586 = vmax.f32 %v585, 0.0
    %v587 = vrot.slane %v586, 4
    %v588 = vadd.f32 %v586, %v587
    %v589 = vrot.slane %v588, 2
    %v590 = vadd.f32 %v588, %v589
    %v591 = vrot.slane %v590, 1
    %v592 = vadd.f32 %v590, %v591
    %s593 = scalar_lea.vmem [#allocation2], 264
    %v594 = vld [vmem:[%s593] sm:$0xff]
    %v595 = vmul.f32 %v585, 0.999
    %v596 = vadd.f32 %v595, %v33
    %v597 = vmul.f32 %v586, 0.001
    %v598 = vadd.f32 %v596, %v597
    %v599 = vmul.f32 %v592, 0.001
    %v600 = vsub.f32 %v598, %v599
    %v601 = vmul.f32 %v594, 0.031622775
    %v602 = vadd.f32 %v600, %v601
    %v603 = vmax.f32 %v602, 0.0
    %v604 = vrot.slane %v603, 4
    %v605 = vadd.f32 %v603, %v604
    %v606 = vrot.slane %v605, 2
    %v607 = vadd.f32 %v605, %v606
    %v608 = vrot.slane %v607, 1
    %v609 = vadd.f32 %v607, %v608
    %s610 = scalar_lea.vmem [#allocation2], 272
    %v611 = vld [vmem:[%s610] sm:$0xff]
    %v612 = vmul.f32 %v602, 0.999
    %v613 = vadd.f32 %v612, %v33
    %v614 = vmul.f32 %v603, 0.001
    %v615 = vadd.f32 %v613, %v614
    %v616 = vmul.f32 %v609, 0.001
    %v617 = vsub.f32 %v615, %v616
    %v618 = vmul.f32 %v611, 0.031622775
    %v619 = vadd.f32 %v617, %v618
    %v620 = vmax.f32 %v619, 0.0
    %v621 = vrot.slane %v620, 4
    %v622 = vadd.f32 %v620, %v621
    %v623 = vrot.slane %v622, 2
    %v624 = vadd.f32 %v622, %v623
    %v625 = vrot.slane %v624, 1
    %v626 = vadd.f32 %v624, %v625
    %s627 = scalar_lea.vmem [#allocation2], 280
    %v628 = vld [vmem:[%s627] sm:$0xff]
    %v629 = vmul.f32 %v619, 0.999
    %v630 = vadd.f32 %v629, %v33
    %v631 = vmul.f32 %v620, 0.001
    %v632 = vadd.f32 %v630, %v631
    %v633 = vmul.f32 %v626, 0.001
    %v634 = vsub.f32 %v632, %v633
    %v635 = vmul.f32 %v628, 0.031622775
    %v636 = vadd.f32 %v634, %v635
    %v637 = vmax.f32 %v636, 0.0
    %v638 = vrot.slane %v637, 4
    %v639 = vadd.f32 %v637, %v638
    %v640 = vrot.slane %v639, 2
    %v641 = vadd.f32 %v639, %v640
    %v642 = vrot.slane %v641, 1
    %v643 = vadd.f32 %v641, %v642
    %s644 = scalar_lea.vmem [#allocation2], 288
    %v645 = vld [vmem:[%s644] sm:$0xff]
    %v646 = vmul.f32 %v636, 0.999
    %v647 = vadd.f32 %v646, %v33
    %v648 = vmul.f32 %v637, 0.001
    %v649 = vadd.f32 %v647, %v648
    %v650 = vmul.f32 %v643, 0.001
    %v651 = vsub.f32 %v649, %v650
    %v652 = vmul.f32 %v645, 0.031622775
    %v653 = vadd.f32 %v651, %v652
    %v654 = vmax.f32 %v653, 0.0
    %v655 = vrot.slane %v654, 4
    %v656 = vadd.f32 %v654, %v655
    %v657 = vrot.slane %v656, 2
    %v658 = vadd.f32 %v656, %v657
    %v659 = vrot.slane %v658, 1
    %v660 = vadd.f32 %v658, %v659
    %s661 = scalar_lea.vmem [#allocation2], 296
    %v662 = vld [vmem:[%s661] sm:$0xff]
    %v663 = vmul.f32 %v653, 0.999
    %v664 = vadd.f32 %v663, %v33
    %v665 = vmul.f32 %v654, 0.001
    %v666 = vadd.f32 %v664, %v665
    %v667 = vmul.f32 %v660, 0.001
    %v668 = vsub.f32 %v666, %v667
    %v669 = vmul.f32 %v662, 0.031622775
    %v670 = vadd.f32 %v668, %v669
    %v671 = vmax.f32 %v670, 0.0
    %v672 = vrot.slane %v671, 4
    %v673 = vadd.f32 %v671, %v672
    %v674 = vrot.slane %v673, 2
    %v675 = vadd.f32 %v673, %v674
    %v676 = vrot.slane %v675, 1
    %v677 = vadd.f32 %v675, %v676
    %s678 = scalar_lea.vmem [#allocation2], 304
    %v679 = vld [vmem:[%s678] sm:$0xff]
    %v680 = vmul.f32 %v670, 0.999
    %v681 = vadd.f32 %v680, %v33
    %v682 = vmul.f32 %v671, 0.001
    %v683 = vadd.f32 %v681, %v682
    %v684 = vmul.f32 %v677, 0.001
    %v685 = vsub.f32 %v683, %v684
    %v686 = vmul.f32 %v679, 0.031622775
    %v687 = vadd.f32 %v685, %v686
    %v688 = vmax.f32 %v687, 0.0
    %v689 = vrot.slane %v688, 4
    %v690 = vadd.f32 %v688, %v689
    %v691 = vrot.slane %v690, 2
    %v692 = vadd.f32 %v690, %v691
    %v693 = vrot.slane %v692, 1
    %v694 = vadd.f32 %v692, %v693
    %s695 = scalar_lea.vmem [#allocation2], 312
    %v696 = vld [vmem:[%s695] sm:$0xff]
    %v697 = vmul.f32 %v687, 0.999
    %v698 = vadd.f32 %v697, %v33
    %v699 = vmul.f32 %v688, 0.001
    %v700 = vadd.f32 %v698, %v699
    %v701 = vmul.f32 %v694, 0.001
    %v702 = vsub.f32 %v700, %v701
    %v703 = vmul.f32 %v696, 0.031622775
    %v704 = vadd.f32 %v702, %v703
    %v705 = vmax.f32 %v704, 0.0
    %v706 = vrot.slane %v705, 4
    %v707 = vadd.f32 %v705, %v706
    %v708 = vrot.slane %v707, 2
    %v709 = vadd.f32 %v707, %v708
    %v710 = vrot.slane %v709, 1
    %v711 = vadd.f32 %v709, %v710
    %s712 = scalar_lea.vmem [#allocation2], 320
    %v713 = vld [vmem:[%s712] sm:$0xff]
    %v714 = vmul.f32 %v704, 0.999
    %v715 = vadd.f32 %v714, %v33
    %v716 = vmul.f32 %v705, 0.001
    %v717 = vadd.f32 %v715, %v716
    %v718 = vmul.f32 %v711, 0.001
    %v719 = vsub.f32 %v717, %v718
    %v720 = vmul.f32 %v713, 0.031622775
    %v721 = vadd.f32 %v719, %v720
    %v722 = vmax.f32 %v721, 0.0
    %v723 = vrot.slane %v722, 4
    %v724 = vadd.f32 %v722, %v723
    %v725 = vrot.slane %v724, 2
    %v726 = vadd.f32 %v724, %v725
    %v727 = vrot.slane %v726, 1
    %v728 = vadd.f32 %v726, %v727
    %s729 = scalar_lea.vmem [#allocation2], 328
    %v730 = vld [vmem:[%s729] sm:$0xff]
    %v731 = vmul.f32 %v721, 0.999
    %v732 = vadd.f32 %v731, %v33
    %v733 = vmul.f32 %v722, 0.001
    %v734 = vadd.f32 %v732, %v733
    %v735 = vmul.f32 %v728, 0.001
    %v736 = vsub.f32 %v734, %v735
    %v737 = vmul.f32 %v730, 0.031622775
    %v738 = vadd.f32 %v736, %v737
    %v739 = vmax.f32 %v738, 0.0
    %v740 = vrot.slane %v739, 4
    %v741 = vadd.f32 %v739, %v740
    %v742 = vrot.slane %v741, 2
    %v743 = vadd.f32 %v741, %v742
    %v744 = vrot.slane %v743, 1
    %v745 = vadd.f32 %v743, %v744
    %s746 = scalar_lea.vmem [#allocation2], 336
    %v747 = vld [vmem:[%s746] sm:$0xff]
    %v748 = vmul.f32 %v738, 0.999
    %v749 = vadd.f32 %v748, %v33
    %v750 = vmul.f32 %v739, 0.001
    %v751 = vadd.f32 %v749, %v750
    %v752 = vmul.f32 %v745, 0.001
    %v753 = vsub.f32 %v751, %v752
    %v754 = vmul.f32 %v747, 0.031622775
    %v755 = vadd.f32 %v753, %v754
    %v756 = vmax.f32 %v755, 0.0
    %v757 = vrot.slane %v756, 4
    %v758 = vadd.f32 %v756, %v757
    %v759 = vrot.slane %v758, 2
    %v760 = vadd.f32 %v758, %v759
    %v761 = vrot.slane %v760, 1
    %v762 = vadd.f32 %v760, %v761
    %s763 = scalar_lea.vmem [#allocation2], 344
    %v764 = vld [vmem:[%s763] sm:$0xff]
    %v765 = vmul.f32 %v755, 0.999
    %v766 = vadd.f32 %v765, %v33
    %v767 = vmul.f32 %v756, 0.001
    %v768 = vadd.f32 %v766, %v767
    %v769 = vmul.f32 %v762, 0.001
    %v770 = vsub.f32 %v768, %v769
    %v771 = vmul.f32 %v764, 0.031622775
    %v772 = vadd.f32 %v770, %v771
    %v773 = vmax.f32 %v772, 0.0
    %v774 = vrot.slane %v773, 4
    %v775 = vadd.f32 %v773, %v774
    %v776 = vrot.slane %v775, 2
    %v777 = vadd.f32 %v775, %v776
    %v778 = vrot.slane %v777, 1
    %v779 = vadd.f32 %v777, %v778
    %s780 = scalar_lea.vmem [#allocation2], 352
    %v781 = vld [vmem:[%s780] sm:$0xff]
    %v782 = vmul.f32 %v772, 0.999
    %v783 = vadd.f32 %v782, %v33
    %v784 = vmul.f32 %v773, 0.001
    %v785 = vadd.f32 %v783, %v784
    %v786 = vmul.f32 %v779, 0.001
    %v787 = vsub.f32 %v785, %v786
    %v788 = vmul.f32 %v781, 0.031622775
    %v789 = vadd.f32 %v787, %v788
    %v790 = vmax.f32 %v789, 0.0
    %v791 = vrot.slane %v790, 4
    %v792 = vadd.f32 %v790, %v791
    %v793 = vrot.slane %v792, 2
    %v794 = vadd.f32 %v792, %v793
    %v795 = vrot.slane %v794, 1
    %v796 = vadd.f32 %v794, %v795
    %s797 = scalar_lea.vmem [#allocation2], 360
    %v798 = vld [vmem:[%s797] sm:$0xff]
    %v799 = vmul.f32 %v789, 0.999
    %v800 = vadd.f32 %v799, %v33
    %v801 = vmul.f32 %v790, 0.001
    %v802 = vadd.f32 %v800, %v801
    %v803 = vmul.f32 %v796, 0.001
    %v804 = vsub.f32 %v802, %v803
    %v805 = vmul.f32 %v798, 0.031622775
    %v806 = vadd.f32 %v804, %v805
    %v807 = vmax.f32 %v806, 0.0
    %v808 = vrot.slane %v807, 4
    %v809 = vadd.f32 %v807, %v808
    %v810 = vrot.slane %v809, 2
    %v811 = vadd.f32 %v809, %v810
    %v812 = vrot.slane %v811, 1
    %v813 = vadd.f32 %v811, %v812
    %s814 = scalar_lea.vmem [#allocation2], 368
    %v815 = vld [vmem:[%s814] sm:$0xff]
    %v816 = vmul.f32 %v806, 0.999
    %v817 = vadd.f32 %v816, %v33
    %v818 = vmul.f32 %v807, 0.001
    %v819 = vadd.f32 %v817, %v818
    %v820 = vmul.f32 %v813, 0.001
    %v821 = vsub.f32 %v819, %v820
    %v822 = vmul.f32 %v815, 0.031622775
    %v823 = vadd.f32 %v821, %v822
    %v824 = vmax.f32 %v823, 0.0
    %v825 = vrot.slane %v824, 4
    %v826 = vadd.f32 %v824, %v825
    %v827 = vrot.slane %v826, 2
    %v828 = vadd.f32 %v826, %v827
    %v829 = vrot.slane %v828, 1
    %v830 = vadd.f32 %v828, %v829
    %s831 = scalar_lea.vmem [#allocation2], 376
    %v832 = vld [vmem:[%s831] sm:$0xff]
    %v833 = vmul.f32 %v823, 0.999
    %v834 = vadd.f32 %v833, %v33
    %v835 = vmul.f32 %v824, 0.001
    %v836 = vadd.f32 %v834, %v835
    %v837 = vmul.f32 %v830, 0.001
    %v838 = vsub.f32 %v836, %v837
    %v839 = vmul.f32 %v832, 0.031622775
    %v840 = vadd.f32 %v838, %v839
    %v841 = vmax.f32 %v840, 0.0
    %v842 = vrot.slane %v841, 4
    %v843 = vadd.f32 %v841, %v842
    %v844 = vrot.slane %v843, 2
    %v845 = vadd.f32 %v843, %v844
    %v846 = vrot.slane %v845, 1
    %v847 = vadd.f32 %v845, %v846
    %s848 = scalar_lea.vmem [#allocation2], 384
    %v849 = vld [vmem:[%s848] sm:$0xff]
    %v850 = vmul.f32 %v840, 0.999
    %v851 = vadd.f32 %v850, %v33
    %v852 = vmul.f32 %v841, 0.001
    %v853 = vadd.f32 %v851, %v852
    %v854 = vmul.f32 %v847, 0.001
    %v855 = vsub.f32 %v853, %v854
    %v856 = vmul.f32 %v849, 0.031622775
    %v857 = vadd.f32 %v855, %v856
    %v858 = vmax.f32 %v857, 0.0
    %v859 = vrot.slane %v858, 4
    %v860 = vadd.f32 %v858, %v859
    %v861 = vrot.slane %v860, 2
    %v862 = vadd.f32 %v860, %v861
    %v863 = vrot.slane %v862, 1
    %v864 = vadd.f32 %v862, %v863
    %s865 = scalar_lea.vmem [#allocation2], 392
    %v866 = vld [vmem:[%s865] sm:$0xff]
    %v867 = vmul.f32 %v857, 0.999
    %v868 = vadd.f32 %v867, %v33
    %v869 = vmul.f32 %v858, 0.001
    %v870 = vadd.f32 %v868, %v869
    %v871 = vmul.f32 %v864, 0.001
    %v872 = vsub.f32 %v870, %v871
    %v873 = vmul.f32 %v866, 0.031622775
    %v874 = vadd.f32 %v872, %v873
    %v875 = vmax.f32 %v874, 0.0
    %876 = vst [vmem:[#allocation5] sm:$0x1] 0.5
    %v877 = vrot.slane %v875, 4
    %v878 = vmax.f32 %v875, %v877
    %v879 = vrot.slane %v878, 2
    %v880 = vmax.f32 %v878, %v879
    %v881 = vrot.slane %v880, 1
    %v882 = vmax.f32 %v880, %v881
    %v883 = vlaneseq
    %v884 = vshrl.u32 %v883, 7
    %vm885 = vcmp.eq.f32.partialorder %v875, %v882
    %v886 = vsel %vm885, %v884, 2147483647
    %v887 = vrot.slane %v886, 4
    %vm888 = vcmp.lt.s32.totalorder %v886, %v887
    %v889 = vsel %vm888, %v886, %v887
    %v890 = vrot.slane %v889, 2
    %vm891 = vcmp.lt.s32.totalorder %v889, %v890
    %v892 = vsel %vm891, %v889, %v890
    %v893 = vrot.slane %v892, 1
    %vm894 = vcmp.lt.s32.totalorder %v892, %v893
    %v895 = vsel %vm894, %v892, %v893
    %896 = vst [vmem:[#allocation6] sm:$0x1] %v895
    // Predicated region
    $region14: #{tpu_custom_call.1} parent=1 // pred_check
      _
    $region15: #{tpu_custom_call.1} parent=1 // pred_check_branch
      %898 = sbr.rel (0) target = $region17
    $region16: #{tpu_custom_call.1} parent=1 // pred_region
      %s900 = ssub.s32 16, 16
      %901 = vsyncadd [#allocation4], %s900
      %s903 = sshll.u32 [#allocation5], 4
      %s904 = int_to_ptr.vmem [resolvable:$true] %s903
      %906 = dma.vmem_to_hbm [thread:$0]  %s904, 16, %s2, [#allocation4]
    $region17: #{tpu_custom_call.1} parent=1 // pred_fallthru
      _
    // Predicated region
    $region18: #{tpu_custom_call.1} parent=1 // pred_check
      _
    $region19: #{tpu_custom_call.1} parent=1 // pred_check_branch
      %908 = sbr.rel (0) target = $region21
    $region20: #{tpu_custom_call.1} parent=1 // pred_region
      %s910 = ssub.s32 16, 16
      %911 = vsyncadd [#allocation7], %s910
      %s913 = sshll.u32 [#allocation6], 4
      %s914 = int_to_ptr.vmem [resolvable:$true] %s913
      %916 = dma.vmem_to_hbm [thread:$0]  %s914, 16, %s3, [#allocation7]
    $region21: #{tpu_custom_call.1} parent=1 // pred_fallthru
      _
    // Predicated region
    $region22: #{tpu_custom_call.1} parent=1 // pred_check
      _
    $region23: #{tpu_custom_call.1} parent=1 // pred_check_branch
      %918 = sbr.rel (0) target = $region25
    $region24: #{tpu_custom_call.1} parent=1 // pred_region
      %919 = dma.done [#allocation4], 16
    $region25: #{tpu_custom_call.1} parent=1 // pred_fallthru
      _
    // Predicated region
    $region26: #{tpu_custom_call.1} parent=1 // pred_check
      _
    $region27: #{tpu_custom_call.1} parent=1 // pred_check_branch
      %921 = sbr.rel (0) target = $region29
    $region28: #{tpu_custom_call.1} parent=1 // pred_region
      %922 = dma.done [#allocation7], 16
    $region29: #{tpu_custom_call.1} parent=1 // pred_fallthru
      _
    %923 = vsyncpa [#allocation3], 1
    %924 = vsyncpa [#allocation4], 1
    %925 = vsyncpa [#allocation7], 1

</llo_original>
